<compile_context>
chip_gen: v6e
topology: v6e:2x2x1
jax: 0.10.0
libtpu: 0.0.40
codegen_flags: <defaults>
</compile_context>

<pallas_src>
import functools
import math

import jax
import jax.numpy as jnp
from jax.experimental import pallas as pl
from jax.experimental.pallas import tpu as pltpu


def gqa_kernel(x_ref, wqkv_ref, wo_ref,
               cosq_ref, sinq_ref, cosk_ref, sink_ref,
               o_ref, acc_ref, qstack_ref, ctx_ref,
               *, group_size, head_dim):
    """One grid step = (batch element b, kv-group g)."""
    T = x_ref.shape[1]
    hd = head_dim
    half = hd // 2
    gs = group_size
    gw = gs * hd
    g = pl.program_id(1)
    cdt = ctx_ref.dtype                      # bf16 compute dtype

    @pl.when(g == 0)
    def _init():
        acc_ref[...] = jnp.zeros_like(acc_ref)

    x = x_ref[0]                             # (T, d_in) bf16, no upcast
    # Fused Q|K|V projection for this kv-group: one MXU pass, N = gw + 2*hd.
    qkv = jnp.dot(x, wqkv_ref[0], preferred_element_type=jnp.float32)
    k = qkv[:, gw:gw + hd]                   # (T, hd) f32
    v = qkv[:, gw + hd:]                     # (T, hd) f32

    # RoPE on K: rotate-half == lane roll by hd/2; the sign is folded into
    # sin_k in the wrapper.  pltpu.roll requires a non-negative axis (axis=1).
    k = k * cosk_ref[...] + pltpu.roll(k, shift=half, axis=1) * sink_ref[...]
    k = k.astype(cdt)
    v = v.astype(cdt)

    # RoPE'd queries of all gs heads of this group, stacked along the MXU M
    # dimension (gs*T, hd).  Writing each head into the scratch right away
    # bounds the live range to one head slice.  1/sqrt(hd) is folded into
    # cos_q/sin_q in the wrapper.
    for h in range(gs):
        qh = qkv[:, h * hd:(h + 1) * hd]
        qh = qh * cosq_ref[...] + pltpu.roll(qh, shift=half, axis=1) * sinq_ref[...]
        qstack_ref[h * T:(h + 1) * T, :] = qh.astype(cdt)

    # Scores for every head of this group in one matmul: contract on dim 1 of
    # both operands (q @ k^T without materializing the transpose).
    s = jax.lax.dot_general(qstack_ref[...], k,
                            dimension_numbers=(((1,), (1,)), ((), ())),
                            preferred_element_type=jnp.float32)   # (gs*T, T)

    # Causal mask generated in-kernel for the stacked scores.  gs copies of a
    # (T, T) row-index iota are concatenated along sublanes so the query
    # position of stacked row h*T + t is t.  Large finite negative (NaN-safe).
    qpos = jnp.concatenate(
        [jax.lax.broadcasted_iota(jnp.int32, (T, T), 0)] * gs, axis=0)
    cols = jax.lax.broadcasted_iota(jnp.int32, (gs * T, T), 1)
    s = jnp.where(cols <= qpos, s, jnp.float32(-1e30))

    # Softmax over keys (scale already folded into the query RoPE tables).
    m = jnp.max(s, axis=-1, keepdims=True)
    e = jnp.exp(s - m)
    l = jnp.sum(e, axis=-1, keepdims=True)
    p = (e * pl.reciprocal(l, approx=True)).astype(cdt)           # EUP slot

    # P @ V for all heads at once, then lane-aligned scatter of the per-head
    # context columns into the (T, gs*hd) layout the out-projection needs.
    ctx_stacked = jnp.dot(p, v, preferred_element_type=jnp.float32)  # (gs*T, hd)
    for h in range(gs):
        ctx_ref[:, h * hd:(h + 1) * hd] = (
            ctx_stacked[h * T:(h + 1) * T, :].astype(cdt))

    # Out-projection contribution of this kv-group, accumulated across the
    # (arbitrary) group grid axis in an f32 VMEM accumulator.
    acc_ref[...] += jnp.dot(ctx_ref[...], wo_ref[0],
                            preferred_element_type=jnp.float32)

    @pl.when(g == pl.num_programs(1) - 1)
    def _finalize():
        o_ref[0] = acc_ref[...].astype(o_ref.dtype)


def grouped_query_attention(x, cos, sin, wq, wk, wv, wo,
                            *, num_heads, num_kv_groups):
    B, T, d_in = x.shape
    d_out = wq.shape[0]
    head_dim = d_out // num_heads
    gs = num_heads // num_kv_groups
    G = num_kv_groups
    gw = gs * head_dim
    half = head_dim // 2
    f32 = jnp.float32
    cdt = jnp.bfloat16                        # MXU compute dtype

    # --- one-time layout / dtype plumbing in XLA (outside the kernel) -------
    # Pre-transpose weights to (in, out), split per kv-group, and pack Q|K|V
    # into a single fused projection weight per group.
    wq_g = wq.T.reshape(d_in, G, gw).transpose(1, 0, 2)          # (G, d_in, gw)
    wk_g = wk.T.reshape(d_in, G, head_dim).transpose(1, 0, 2)    # (G, d_in, hd)
    wv_g = wv.T.reshape(d_in, G, head_dim).transpose(1, 0, 2)    # (G, d_in, hd)
    wqkv_g = jnp.concatenate([wq_g, wk_g, wv_g], axis=-1).astype(cdt)
    wo_g = wo.T.reshape(G, gw, d_out).astype(cdt)                # (G, gw, d_out)

    # RoPE tables: fold the rotate-half sign into sin and the softmax scale
    # 1/sqrt(head_dim) into the query tables; ship them in bf16.
    sign = jnp.concatenate([-jnp.ones((1, half), f32),
                            jnp.ones((1, half), f32)], axis=1)
    scale = 1.0 / math.sqrt(head_dim)
    cos32 = cos.astype(f32)[:T]
    sin32 = (sin.astype(f32) * sign)[:T]
    cos_q = (cos32 * scale).astype(cdt)
    sin_q = (sin32 * scale).astype(cdt)
    cos_k = cos32.astype(cdt)
    sin_k = sin32.astype(cdt)

    x_c = x.astype(cdt)

    # --- VMEM budget derived from actual block sizes (v7x-safe clamp) -------
    isz = lambda dt: jnp.dtype(dt).itemsize
    blk = 0
    blk += 2 * T * d_in * isz(cdt)                        # x (double-buffered)
    blk += 2 * d_in * (gw + 2 * head_dim) * isz(cdt)      # fused QKV weight
    blk += 2 * gw * d_out * isz(cdt)                      # out-proj weight
    blk += 4 * T * head_dim * isz(cdt)                    # RoPE tables (x1 buf)
    blk += 2 * T * d_out * isz(x.dtype)                   # output block
    blk += T * d_out * 4 + gs * T * head_dim * isz(cdt) + T * gw * isz(cdt)
    cap = 128 * 1024 * 1024
    try:
        cap = int(getattr(pltpu.get_tpu_info(), "vmem_capacity_bytes", cap))
    except Exception:
        pass
    vmem_limit = min(max(2 * blk, 32 * 1024 * 1024), (3 * cap) // 4)

    kernel = functools.partial(gqa_kernel, group_size=gs, head_dim=head_dim)
    const = lambda b, g: (0, 0)
    rope_spec = lambda: pl.BlockSpec((T, head_dim), const,
                                     pipeline_mode=pl.Buffered(1))

    return pl.pallas_call(
        kernel,
        out_shape=jax.ShapeDtypeStruct((B, T, d_out), x.dtype),
        grid_spec=pltpu.PrefetchScalarGridSpec(
            num_scalar_prefetch=0,
            grid=(B, G),
            in_specs=[
                pl.BlockSpec((1, T, d_in), lambda b, g: (b, 0, 0)),          # x
                pl.BlockSpec((1, d_in, gw + 2 * head_dim),
                             lambda b, g: (g, 0, 0)),                        # Wq|Wk|Wv
                pl.BlockSpec((1, gw, d_out), lambda b, g: (g, 0, 0)),        # Wo slice
                rope_spec(),                                                 # cos_q
                rope_spec(),                                                 # sin_q
                rope_spec(),                                                 # cos_k
                rope_spec(),                                                 # sin_k
            ],
            out_specs=pl.BlockSpec((1, T, d_out), lambda b, g: (b, 0, 0)),
            scratch_shapes=[
                pltpu.VMEM((T, d_out), jnp.float32),          # out-proj accumulator
                pltpu.VMEM((gs * T, head_dim), cdt),          # stacked RoPE'd queries
                pltpu.VMEM((T, gw), cdt),                     # per-group context
            ],
        ),
        compiler_params=pltpu.CompilerParams(
            dimension_semantics=("parallel", "arbitrary"),
            vmem_limit_bytes=int(vmem_limit)),
    )(x_c, wqkv_g, wo_g, cos_q, sin_q, cos_k, sin_k)


# ---------------------------------------------------------------------------
# Pure-JAX reference (mirrors the PyTorch forward exactly, all f32).
# ---------------------------------------------------------------------------
def ref_forward(x, mask_bool, cos, sin, wq, wk, wv, wo,
                *, num_heads, num_kv_groups):
    B, T, d_in = x.shape
    d_out = wq.shape[0]
    hd = d_out // num_heads
    gs = num_heads // num_kv_groups

    q = x @ wq.T
    k = x @ wk.T
    v = x @ wv.T
    q = q.reshape(B, T, num_heads, hd).transpose(0, 2, 1, 3)
    k = k.reshape(B, T, num_kv_groups, hd).transpose(0, 2, 1, 3)
    v = v.reshape(B, T, num_kv_groups, hd).transpose(0, 2, 1, 3)

    def rope(t):
        h = hd // 2
        c = cos[None, None, :T, :]
        s = sin[None, None, :T, :]
        rot = jnp.concatenate([-t[..., h:], t[..., :h]], axis=-1)
        return t * c + rot * s

    q = rope(q)
    k = rope(k)
    k = jnp.repeat(k, gs, axis=1)
    v = jnp.repeat(v, gs, axis=1)

    scores = q @ jnp.swapaxes(k, 2, 3)
    scores = jnp.where(mask_bool[None, None, :T, :T], -jnp.inf, scores)
    w = jax.nn.softmax(scores / math.sqrt(hd), axis=-1)
    ctx = (w @ v).transpose(0, 2, 1, 3).reshape(B, T, d_out)
    return ctx @ wo.T


if __name__ == "__main__":
    # Small but lane-aligned shapes (head_dim = 128 keeps MXU/VPU tiles dense).
    B, T = 2, 16
    d_in = 128
    num_heads, num_kv_groups = 4, 2
    head_dim = 128
    d_out = num_heads * head_dim           # 512

    key = jax.random.PRNGKey(0)
    kx, kq, kk, kv, ko = jax.random.split(key, 5)
    x = jax.random.normal(kx, (B, T, d_in), dtype=jnp.float32)
    wq = jax.random.normal(kq, (d_out, d_in), dtype=jnp.float32) * 0.05
    wk = jax.random.normal(kk, (num_kv_groups * head_dim, d_in), dtype=jnp.float32) * 0.05
    wv = jax.random.normal(kv, (num_kv_groups * head_dim, d_in), dtype=jnp.float32) * 0.05
    wo = jax.random.normal(ko, (d_out, d_out), dtype=jnp.float32) * 0.05

    # RoPE tables (theta_base=10000), shape (T, head_dim).
    inv_freq = 1.0 / (10000.0 ** (jnp.arange(0, head_dim, 2, dtype=jnp.float32) / head_dim))
    pos = jnp.arange(T, dtype=jnp.float32)
    angles = pos[:, None] * inv_freq[None, :]
    angles = jnp.concatenate([angles, angles], axis=-1)
    cos = jnp.cos(angles)
    sin = jnp.sin(angles)

    out = grouped_query_attention(
        x, cos, sin, wq, wk, wv, wo,
        num_heads=num_heads, num_kv_groups=num_kv_groups)
    out = jax.block_until_ready(out)

    mask_bool = jnp.triu(jnp.ones((T, T), dtype=bool), k=1)
    ref = ref_forward(x, mask_bool, cos, sin, wq, wk, wv, wo,
                      num_heads=num_heads, num_kv_groups=num_kv_groups)

    assert out.shape == (B, T, d_out)
    # The kernel runs its matmuls in bf16 with f32 accumulation (per the perf
    # review) and uses the EUP approximate reciprocal for the softmax divide;
    # the reference is all-f32, so the tolerance reflects bf16 mixed precision
    # rather than a bug (real bugs are O(0.1+)).
    assert jnp.allclose(out, ref, atol=2e-2, rtol=2e-2), "mismatch vs reference"
    print("KERNEL_OK")
</pallas_src>

<mosaic_0001>
module attributes {stable_mosaic.version = 11 : i64} {
  func.func @gqa_kernel(%arg0: i32, %arg1: i32, %arg2: memref<1x16x128xbf16, #tpu.memory_space<vmem>>, %arg3: memref<1x128x512xbf16, #tpu.memory_space<vmem>>, %arg4: memref<1x256x512xbf16, #tpu.memory_space<vmem>>, %arg5: memref<16x128xbf16, #tpu.memory_space<vmem>>, %arg6: memref<16x128xbf16, #tpu.memory_space<vmem>>, %arg7: memref<16x128xbf16, #tpu.memory_space<vmem>>, %arg8: memref<16x128xbf16, #tpu.memory_space<vmem>>, %arg9: memref<1x16x512xf32, #tpu.memory_space<vmem>>, %arg10: memref<16x512xf32, #tpu.memory_space<vmem>>, %arg11: memref<32x128xbf16, #tpu.memory_space<vmem>>, %arg12: memref<16x256xbf16, #tpu.memory_space<vmem>>) attributes {dimension_semantics = [#tpu.dimension_semantics<parallel>, #tpu.dimension_semantics<arbitrary>], iteration_bounds = array<i64: 2, 2>, scalar_prefetch = 0 : i64, scratch_operands = 3 : i64, tpu.core_type = #tpu.core_type<tc>, window_params = [{transform_indices = @transform_0, window_bounds = array<i64: 1, 16, 128>}, {transform_indices = @transform_1, window_bounds = array<i64: 1, 128, 512>}, {transform_indices = @transform_2, window_bounds = array<i64: 1, 256, 512>}, {pipeline_mode = #tpu.pipeline_mode<synchronous>, transform_indices = @transform_3, window_bounds = array<i64: 16, 128>}, {pipeline_mode = #tpu.pipeline_mode<synchronous>, transform_indices = @transform_4, window_bounds = array<i64: 16, 128>}, {pipeline_mode = #tpu.pipeline_mode<synchronous>, transform_indices = @transform_5, window_bounds = array<i64: 16, 128>}, {pipeline_mode = #tpu.pipeline_mode<synchronous>, transform_indices = @transform_6, window_bounds = array<i64: 16, 128>}, {transform_indices = @transform_7, window_bounds = array<i64: 1, 16, 512>}]} {
    %c0_i32 = arith.constant 0 : i32
    %0 = arith.cmpi eq, %arg1, %c0_i32 : i32
    %1 = arith.extui %0 : i1 to i32
    %c0_i32_0 = arith.constant 0 : i32
    %2 = arith.cmpi ne, %1, %c0_i32_0 : i32
    scf.if %2 {
      %cst_44 = arith.constant 0.000000e+00 : f32
      %78 = vector.broadcast %cst_44 : f32 to vector<16x512xf32>
      %c0_45 = arith.constant 0 : index
      %c0_46 = arith.constant 0 : index
      %79 = vector.load %arg10[%c0_45, %c0_46] : memref<16x512xf32, #tpu.memory_space<vmem>>, vector<16x512xf32>
      tpu.vector_store %arg10[%c0_45, %c0_46], %78 {strides = array<i32>} : memref<16x512xf32, #tpu.memory_space<vmem>>, vector<16x512xf32>,
    } else {
    }
    %c0 = arith.constant 0 : index
    %c0_1 = arith.constant 0 : index
    %c0_2 = arith.constant 0 : index
    %3 = vector.load %arg2[%c0, %c0_1, %c0_2] : memref<1x16x128xbf16, #tpu.memory_space<vmem>>, vector<1x16x128xbf16>
    %4 = vector.shape_cast %3 : vector<1x16x128xbf16> to vector<16x128xbf16>
    %c0_3 = arith.constant 0 : index
    %c0_4 = arith.constant 0 : index
    %c0_5 = arith.constant 0 : index
    %5 = vector.load %arg3[%c0_3, %c0_4, %c0_5] : memref<1x128x512xbf16, #tpu.memory_space<vmem>>, vector<1x128x512xbf16>
    %6 = vector.shape_cast %5 : vector<1x128x512xbf16> to vector<128x512xbf16>
    %cst = arith.constant dense<0.000000e+00> : vector<16x512xf32>
    %7 = tpu.matmul %4, %6, %cst {dimension_numbers = #tpu.dot_dimension_numbers<[1], [0], [0], [1], [0, 0, 1, 1], [], []>} : vector<16x128xbf16>, vector<128x512xbf16>, vector<16x512xf32> -> vector<16x512xf32>
    %8 = vector.extract_strided_slice %7 {offsets = [0, 256], sizes = [16, 128], strides = [1, 1]} : vector<16x512xf32> to vector<16x128xf32>
    %9 = vector.extract_strided_slice %7 {offsets = [0, 384], sizes = [16, 128], strides = [1, 1]} : vector<16x512xf32> to vector<16x128xf32>
    %c0_6 = arith.constant 0 : index
    %c0_7 = arith.constant 0 : index
    %10 = vector.load %arg7[%c0_6, %c0_7] : memref<16x128xbf16, #tpu.memory_space<vmem>>, vector<16x128xbf16>
    %11 = arith.extf %10 : vector<16x128xbf16> to vector<16x128xf32>
    %12 = arith.mulf %8, %11 : vector<16x128xf32>
    %c64_i32 = arith.constant 64 : i32
    %13 = tpu.dynamic_rotate %8 by %c64_i32 dim 1 : vector<16x128xf32>, i32 -> vector<16x128xf32>
    %c0_8 = arith.constant 0 : index
    %c0_9 = arith.constant 0 : index
    %14 = vector.load %arg8[%c0_8, %c0_9] : memref<16x128xbf16, #tpu.memory_space<vmem>>, vector<16x128xbf16>
    %15 = arith.extf %14 : vector<16x128xbf16> to vector<16x128xf32>
    %16 = arith.mulf %13, %15 : vector<16x128xf32>
    %17 = arith.addf %12, %16 : vector<16x128xf32>
    %18 = arith.truncf %17 : vector<16x128xf32> to vector<16x128xbf16>
    %19 = arith.truncf %9 : vector<16x128xf32> to vector<16x128xbf16>
    %20 = vector.extract_strided_slice %7 {offsets = [0, 0], sizes = [16, 128], strides = [1, 1]} : vector<16x512xf32> to vector<16x128xf32>
    %c0_10 = arith.constant 0 : index
    %c0_11 = arith.constant 0 : index
    %21 = vector.load %arg5[%c0_10, %c0_11] : memref<16x128xbf16, #tpu.memory_space<vmem>>, vector<16x128xbf16>
    %22 = arith.extf %21 : vector<16x128xbf16> to vector<16x128xf32>
    %23 = arith.mulf %20, %22 : vector<16x128xf32>
    %c64_i32_12 = arith.constant 64 : i32
    %24 = tpu.dynamic_rotate %20 by %c64_i32_12 dim 1 : vector<16x128xf32>, i32 -> vector<16x128xf32>
    %c0_13 = arith.constant 0 : index
    %c0_14 = arith.constant 0 : index
    %25 = vector.load %arg6[%c0_13, %c0_14] : memref<16x128xbf16, #tpu.memory_space<vmem>>, vector<16x128xbf16>
    %26 = arith.extf %25 : vector<16x128xbf16> to vector<16x128xf32>
    %27 = arith.mulf %24, %26 : vector<16x128xf32>
    %28 = arith.addf %23, %27 : vector<16x128xf32>
    %29 = arith.truncf %28 : vector<16x128xf32> to vector<16x128xbf16>
    %c0_15 = arith.constant 0 : index
    %c0_16 = arith.constant 0 : index
    %30 = vector.load %arg11[%c0_15, %c0_16] : memref<32x128xbf16, #tpu.memory_space<vmem>>, vector<16x128xbf16>
    tpu.vector_store %arg11[%c0_15, %c0_16], %29 {strides = array<i32>} : memref<32x128xbf16, #tpu.memory_space<vmem>>, vector<16x128xbf16>,
    %31 = vector.extract_strided_slice %7 {offsets = [0, 128], sizes = [16, 128], strides = [1, 1]} : vector<16x512xf32> to vector<16x128xf32>
    %c0_17 = arith.constant 0 : index
    %c0_18 = arith.constant 0 : index
    %32 = vector.load %arg5[%c0_17, %c0_18] : memref<16x128xbf16, #tpu.memory_space<vmem>>, vector<16x128xbf16>
    %33 = arith.extf %32 : vector<16x128xbf16> to vector<16x128xf32>
    %34 = arith.mulf %31, %33 : vector<16x128xf32>
    %c64_i32_19 = arith.constant 64 : i32
    %35 = tpu.dynamic_rotate %31 by %c64_i32_19 dim 1 : vector<16x128xf32>, i32 -> vector<16x128xf32>
    %c0_20 = arith.constant 0 : index
    %c0_21 = arith.constant 0 : index
    %36 = vector.load %arg6[%c0_20, %c0_21] : memref<16x128xbf16, #tpu.memory_space<vmem>>, vector<16x128xbf16>
    %37 = arith.extf %36 : vector<16x128xbf16> to vector<16x128xf32>
    %38 = arith.mulf %35, %37 : vector<16x128xf32>
    %39 = arith.addf %34, %38 : vector<16x128xf32>
    %40 = arith.truncf %39 : vector<16x128xf32> to vector<16x128xbf16>
    %c16 = arith.constant 16 : index
    %c0_22 = arith.constant 0 : index
    %41 = vector.load %arg11[%c16, %c0_22] : memref<32x128xbf16, #tpu.memory_space<vmem>>, vector<16x128xbf16>
    tpu.vector_store %arg11[%c16, %c0_22], %40 {strides = array<i32>} : memref<32x128xbf16, #tpu.memory_space<vmem>>, vector<16x128xbf16>,
    %c0_23 = arith.constant 0 : index
    %c0_24 = arith.constant 0 : index
    %42 = vector.load %arg11[%c0_23, %c0_24] : memref<32x128xbf16, #tpu.memory_space<vmem>>, vector<32x128xbf16>
    %cst_25 = arith.constant dense<0.000000e+00> : vector<32x16xf32>
    %43 = tpu.matmul %42, %18, %cst_25 {dimension_numbers = #tpu.dot_dimension_numbers<[1], [1], [0], [0], [0, 0, 1, 0], [], []>} : vector<32x128xbf16>, vector<16x128xbf16>, vector<32x16xf32> -> vector<32x16xf32>
    %44 = tpu.iota {dimensions = array<i32: 0>} : vector<16x16xi32>
    %45 = tpu.concatenate %44, %44 in 0 : vector<16x16xi32>, vector<16x16xi32> -> vector<32x16xi32>
    %46 = tpu.iota {dimensions = array<i32: 1>} : vector<32x16xi32>
    %47 = arith.cmpi sle, %46, %45 : vector<32x16xi32>
    %cst_26 = arith.constant -1.000000e+30 : f32
    %48 = vector.broadcast %cst_26 : f32 to vector<32x16xf32>
    %49 = arith.select %47, %43, %48 : vector<32x16xi1>, vector<32x16xf32>
    %cst_27 = arith.constant dense<0xFF800000> : vector<32xf32>
    %50 = vector.multi_reduction <maximumf>, %49, %cst_27 [1] : vector<32x16xf32> to vector<32xf32>
    %51 = vector.shape_cast %50 : vector<32xf32> to vector<32x1xf32>
    %52 = vector.broadcast %51 : vector<32x1xf32> to vector<32x16xf32>
    %53 = arith.subf %49, %52 : vector<32x16xf32>
    %54 = math.exp %53 : vector<32x16xf32>
    %cst_28 = arith.constant dense<0.000000e+00> : vector<32xf32>
    %55 = vector.multi_reduction <add>, %54, %cst_28 [1] : vector<32x16xf32> to vector<32xf32>
    %56 = vector.shape_cast %55 : vector<32xf32> to vector<32x1xf32>
    %57 = tpu.reciprocal %56 {approx = true} : vector<32x1xf32> -> vector<32x1xf32>
    %58 = vector.broadcast %57 : vector<32x1xf32> to vector<32x16xf32>
    %59 = arith.mulf %54, %58 : vector<32x16xf32>
    %60 = arith.truncf %59 : vector<32x16xf32> to vector<32x16xbf16>
    %cst_29 = arith.constant dense<0.000000e+00> : vector<32x128xf32>
    %61 = tpu.matmul %60, %19, %cst_29 {dimension_numbers = #tpu.dot_dimension_numbers<[1], [0], [0], [1], [0, 0, 1, 1], [], []>} : vector<32x16xbf16>, vector<16x128xbf16>, vector<32x128xf32> -> vector<32x128xf32>
    %62 = vector.extract_strided_slice %61 {offsets = [0, 0], sizes = [16, 128], strides = [1, 1]} : vector<32x128xf32> to vector<16x128xf32>
    %63 = arith.truncf %62 : vector<16x128xf32> to vector<16x128xbf16>
    %c0_30 = arith.constant 0 : index
    %c0_31 = arith.constant 0 : index
    %64 = vector.load %arg12[%c0_30, %c0_31] : memref<16x256xbf16, #tpu.memory_space<vmem>>, vector<16x128xbf16>
    tpu.vector_store %arg12[%c0_30, %c0_31], %63 {strides = array<i32>} : memref<16x256xbf16, #tpu.memory_space<vmem>>, vector<16x128xbf16>,
    %65 = vector.extract_strided_slice %61 {offsets = [16, 0], sizes = [16, 128], strides = [1, 1]} : vector<32x128xf32> to vector<16x128xf32>
    %66 = arith.truncf %65 : vector<16x128xf32> to vector<16x128xbf16>
    %c0_32 = arith.constant 0 : index
    %c128 = arith.constant 128 : index
    %67 = vector.load %arg12[%c0_32, %c128] : memref<16x256xbf16, #tpu.memory_space<vmem>>, vector<16x128xbf16>
    tpu.vector_store %arg12[%c0_32, %c128], %66 {strides = array<i32>} : memref<16x256xbf16, #tpu.memory_space<vmem>>, vector<16x128xbf16>,
    %c0_33 = arith.constant 0 : index
    %c0_34 = arith.constant 0 : index
    %68 = vector.load %arg10[%c0_33, %c0_34] : memref<16x512xf32, #tpu.memory_space<vmem>>, vector<16x512xf32>
    %c0_35 = arith.constant 0 : index
    %c0_36 = arith.constant 0 : index
    %69 = vector.load %arg12[%c0_35, %c0_36] : memref<16x256xbf16, #tpu.memory_space<vmem>>, vector<16x256xbf16>
    %c0_37 = arith.constant 0 : index
    %c0_38 = arith.constant 0 : index
    %c0_39 = arith.constant 0 : index
    %70 = vector.load %arg4[%c0_37, %c0_38, %c0_39] : memref<1x256x512xbf16, #tpu.memory_space<vmem>>, vector<1x256x512xbf16>
    %71 = vector.shape_cast %70 : vector<1x256x512xbf16> to vector<256x512xbf16>
    %cst_40 = arith.constant dense<0.000000e+00> : vector<16x512xf32>
    %72 = tpu.matmul %69, %71, %cst_40 {dimension_numbers = #tpu.dot_dimension_numbers<[1], [0], [0], [1], [0, 0, 1, 1], [], []>} : vector<16x256xbf16>, vector<256x512xbf16>, vector<16x512xf32> -> vector<16x512xf32>
    %73 = arith.addf %68, %72 : vector<16x512xf32>
    %c0_41 = arith.constant 0 : index
    %c0_42 = arith.constant 0 : index
    %74 = vector.load %arg10[%c0_41, %c0_42] : memref<16x512xf32, #tpu.memory_space<vmem>>, vector<16x512xf32>
    tpu.vector_store %arg10[%c0_41, %c0_42], %73 {strides = array<i32>} : memref<16x512xf32, #tpu.memory_space<vmem>>, vector<16x512xf32>,
    %c1_i32 = arith.constant 1 : i32
    %75 = arith.cmpi eq, %arg1, %c1_i32 : i32
    %76 = arith.extui %75 : i1 to i32
    %c0_i32_43 = arith.constant 0 : i32
    %77 = arith.cmpi ne, %76, %c0_i32_43 : i32
    scf.if %77 {
      %c0_44 = arith.constant 0 : index
      %c0_45 = arith.constant 0 : index
      %78 = vector.load %arg10[%c0_44, %c0_45] : memref<16x512xf32, #tpu.memory_space<vmem>>, vector<16x512xf32>
      %c0_46 = arith.constant 0 : index
      %c0_47 = arith.constant 0 : index
      %c0_48 = arith.constant 0 : index
      %79 = vector.load %arg9[%c0_46, %c0_47, %c0_48] : memref<1x16x512xf32, #tpu.memory_space<vmem>>, vector<1x16x512xf32>
      %80 = vector.shape_cast %79 : vector<1x16x512xf32> to vector<16x512xf32>
      %81 = vector.shape_cast %78 : vector<16x512xf32> to vector<1x16x512xf32>
      tpu.vector_store %arg9[%c0_46, %c0_47, %c0_48], %81 {strides = array<i32>} : memref<1x16x512xf32, #tpu.memory_space<vmem>>, vector<1x16x512xf32>,
    } else {
    }
    return
  }
  func.func @transform_0(%arg0: i32, %arg1: i32) -> (i32, i32, i32) {
    %c0_i32 = arith.constant 0 : i32
    %c0_i32_0 = arith.constant 0 : i32
    %c0_i32_1 = arith.constant 0 : i32
    return %arg0, %c0_i32, %c0_i32_0 : i32, i32, i32
  }
  func.func @transform_1(%arg0: i32, %arg1: i32) -> (i32, i32, i32) {
    %c0_i32 = arith.constant 0 : i32
    %c0_i32_0 = arith.constant 0 : i32
    %c0_i32_1 = arith.constant 0 : i32
    return %arg1, %c0_i32, %c0_i32_0 : i32, i32, i32
  }
  func.func @transform_2(%arg0: i32, %arg1: i32) -> (i32, i32, i32) {
    %c0_i32 = arith.constant 0 : i32
    %c0_i32_0 = arith.constant 0 : i32
    %c0_i32_1 = arith.constant 0 : i32
    return %arg1, %c0_i32, %c0_i32_0 : i32, i32, i32
  }
  func.func @transform_3(%arg0: i32, %arg1: i32) -> (i32, i32) {
    %c0_i32 = arith.constant 0 : i32
    %c0_i32_0 = arith.constant 0 : i32
    %c0_i32_1 = arith.constant 0 : i32
    return %c0_i32, %c0_i32_0 : i32, i32
  }
  func.func @transform_4(%arg0: i32, %arg1: i32) -> (i32, i32) {
    %c0_i32 = arith.constant 0 : i32
    %c0_i32_0 = arith.constant 0 : i32
    %c0_i32_1 = arith.constant 0 : i32
    return %c0_i32, %c0_i32_0 : i32, i32
  }
  func.func @transform_5(%arg0: i32, %arg1: i32) -> (i32, i32) {
    %c0_i32 = arith.constant 0 : i32
    %c0_i32_0 = arith.constant 0 : i32
    %c0_i32_1 = arith.constant 0 : i32
    return %c0_i32, %c0_i32_0 : i32, i32
  }
  func.func @transform_6(%arg0: i32, %arg1: i32) -> (i32, i32) {
    %c0_i32 = arith.constant 0 : i32
    %c0_i32_0 = arith.constant 0 : i32
    %c0_i32_1 = arith.constant 0 : i32
    return %c0_i32, %c0_i32_0 : i32, i32
  }
  func.func @transform_7(%arg0: i32, %arg1: i32) -> (i32, i32, i32) {
    %c0_i32 = arith.constant 0 : i32
    %c0_i32_0 = arith.constant 0 : i32
    %c0_i32_1 = arith.constant 0 : i32
    return %arg0, %c0_i32, %c0_i32_0 : i32, i32, i32
  }
}

</mosaic_0001>

<llo_original>
// kernel: tpu_custom_call.1
$region0: #{tpu_custom_call.1}
  #allocation0 [shape = 'u32[]', space=smem, size = 0x4, offset = 0x4, fixed_abs, tag = 'smem constant byte address 0x4 - core index']
  #allocation1 [shape = 'u32[144,128]{1,0:T(1,128)}', space=vmem, size = 0x12000, scoped, tag = 'internal scratch']
  #allocation2 [shape = 'f32[16,512]{1,0:T(8,128)}', space=vmem, size = 0x8000, scoped, tag = 'scratch operand']
  #allocation3 [shape = 'bf16[32,128]{1,0:T(8,128)(2,1)}', space=vmem, size = 0x2000, scoped, tag = 'scratch operand']
  #allocation4 [shape = 'bf16[16,256]{1,0:T(8,128)(2,1)}', space=vmem, size = 0x2000, scoped, tag = 'scratch operand']
  %s0 = inlined_call_operand.hbm [shape: bf16[2,16,128], index: 0, kind: input, shape index: {}]
  %s1 = inlined_call_operand.hbm [shape: bf16[2,128,512], index: 1, kind: input, shape index: {}]
  %s2 = inlined_call_operand.hbm [shape: bf16[2,256,512], index: 2, kind: input, shape index: {}]
  %s3 = inlined_call_operand.hbm [shape: bf16[16,128], index: 3, kind: input, shape index: {}]
  %s4 = inlined_call_operand.hbm [shape: bf16[16,128], index: 4, kind: input, shape index: {}]
  %s5 = inlined_call_operand.vmem [shape: bf16[16,128], index: 5, kind: input, shape index: {}]
  %s6 = inlined_call_operand.hbm [shape: bf16[16,128], index: 6, kind: input, shape index: {}]
  %s7 = inlined_call_operand.hbm [shape: f32[2,16,512], index: 7, kind: output, shape index: {}]
  %s8 = sld [smem:[#allocation0]]
  $region93: #{tpu_custom_call.1} parent=0
    _
  %s10 = ssub.s32 1, %s8
  %s11 = scalar_select 0, %s10, %s8
  $region1: #{tpu_custom_call.1} parent=0
    #allocation5 [shape = 'u8[8192]{0}', space=vmem, size = 0x2000, scoped, tag = 'input window, operand 0']
    #allocation6 [shape = 's32[2]{0}', space=sflag, size = 0x8, scoped, tag = 'scoped memory for tpu_custom_call.1']
    #allocation7 [shape = 's32[2]{0}', space=sflag, size = 0x8, scoped, tag = 'scoped memory for tpu_custom_call.1']
    #allocation8 [shape = 'u8[262144]{0}', space=vmem, size = 0x40000, scoped, tag = 'input window, operand 1']
    #allocation9 [shape = 's32[2]{0}', space=sflag, size = 0x8, scoped, tag = 'scoped memory for tpu_custom_call.1']
    #allocation10 [shape = 'u8[524288]{0}', space=vmem, size = 0x80000, scoped, tag = 'input window, operand 2']
    #allocation11 [shape = 'u8[4096]{0}', space=vmem, size = 0x1000, scoped, tag = 'input window, operand 3, single buffered']
    #allocation12 [shape = 's32[1]{0}', space=sflag, size = 0x4, scoped, tag = 'scoped memory for tpu_custom_call.1']
    #allocation13 [shape = 'u8[4096]{0}', space=vmem, size = 0x1000, scoped, tag = 'input window, operand 4, single buffered']
    #allocation14 [shape = 'u8[4096]{0}', space=vmem, size = 0x1000, scoped, tag = 'input window, operand 6, single buffered']
    #allocation15 [shape = 's32[1]{0}', space=sflag, size = 0x4, scoped, tag = 'scoped memory for tpu_custom_call.1']
    #allocation16 [shape = 'u8[65536]{0}', space=vmem, size = 0x10000, scoped, tag = 'output window, operand 0']
    %12 = vsyncpa [#allocation6], 0
    %s13 = scalar_lea.sflag [#allocation6], 1
    %14 = vsyncpa %s13, 0
    %15 = vsyncpa [#allocation9], 0
    %s16 = scalar_lea.sflag [#allocation9], 1
    %17 = vsyncpa %s16, 0
    %18 = vsyncpa [#allocation12], 0
    %19 = vsyncpa [#allocation15], 0
    %20 = vsyncpa [#allocation7], 0
    %s21 = scalar_lea.sflag [#allocation7], 1
    %22 = vsyncpa %s21, 0
    loop: start=0, step=1, limit=6
    $region2: #{tpu_custom_call.1} parent=1 // loop_pre_header
      _
    $region3: #{tpu_custom_call.1} parent=1 // loop_header
      %s24 = sphi 0, %s28
      %p25 = scmp.ge.s32.totalorder %s24, 6
      %s31 = sphi 0, %s43
      %s32 = sphi 0, %s39
      %s33 = sphi 0, %s31
      %s34 = sphi 0, %s32
      %s35 = sphi 0, %s33
      %s36 = sphi 0, %s34
      %s46 = sphi 0, %s48
      %s49 = sphi 0, %s46
      %s50 = sphi 0, %s49
      %s66 = sphi 0, %s50
      %s72 = sphi 0, %s74
      %s75 = sphi 0, %s72
      %s76 = sphi 0, %s75
      %s92 = sphi 0, %s76
      %s98 = sphi 0, %s100
      %s101 = sphi 0, %s98
      %s102 = sphi 0, %s101
      %s118 = sphi 0, %s102
      %s122 = sphi 0, %s122
      %s124 = sphi 0, %s122
      %s125 = sphi 0, %s124
      %s139 = sphi 0, %s125
      %s143 = sphi 0, %s143
      %s145 = sphi 0, %s143
      %s146 = sphi 0, %s145
      %s160 = sphi 0, %s146
      %s164 = sphi 0, %s164
      %s166 = sphi 0, %s164
      %s167 = sphi 0, %s166
      %s181 = sphi 0, %s167
      %s185 = sphi 0, %s185
      %s187 = sphi 0, %s185
      %s188 = sphi 0, %s187
      %s202 = sphi 0, %s188
      %s208 = sphi 0, %s210
      %s211 = sphi 0, %s208
      %s212 = sphi 0, %s211
      %s228 = sphi 0, %s212
    $region4: #{tpu_custom_call.1} parent=1 // loop_header_branch
      %27 = sbr.rel (%p25) target = $region8
    $region5: #{tpu_custom_call.1} parent=1 // loop_body
      %s29 = ssub.s32 %s24, 1
      %s30 = ssub.s32 %s24, 2
      %s37 = sadd.s32 1, %s32
      %p38 = scmp.ge.s32.totalorder %s37, 2
      %s39 = scalar_select %p38, 0, %s37
      %s40 = sadd.s32 1, %s31
      %s41 = scalar_select %p38, %s40, %s31
      %p42 = scmp.ge.s32.totalorder %s41, 2
      %s43 = scalar_select %p42, 0, %s41
      %s44 = ssub.s32 %s31, %s43
      %p45 = scmp.eq.s32.totalorder %s44, 0
      %s47 = sadd.s32 %s46, 1
      %s48 = scalar_select %p45, %s46, %s47
      %p51 = pneg %p45
      %p52 = scmp.eq.s32.totalorder %s24, 3
      %p53 = por %p51, %p52
      %p54 = scmp.ne.s32.totalorder %s46, %s49
      %p55 = scmp.eq.s32.totalorder %s24, 0
      %p56 = por %p54, %p55
      %p57 = scmp.ne.s32.totalorder %s46, %s49
      %p58 = scmp.eq.s32.totalorder %s29, 3
      %p59 = por %p57, %p58
      %p60 = scmp.ne.s32.totalorder %s49, %s50
      %p61 = scmp.eq.s32.totalorder %s29, 0
      %p62 = por %p60, %p61
      %p63 = scmp.ne.s32.totalorder %s49, %s50
      %p64 = scmp.eq.s32.totalorder %s30, 3
      %p65 = por %p63, %p64
      %p67 = scmp.ne.s32.totalorder %s50, %s66
      %p68 = scmp.eq.s32.totalorder %s30, 0
      %p69 = por %p67, %p68
      %s70 = ssub.s32 %s32, %s39
      %p71 = scmp.eq.s32.totalorder %s70, 0
      %s73 = sadd.s32 %s72, 1
      %s74 = scalar_select %p71, %s72, %s73
      %p77 = pneg %p71
      %p78 = scmp.eq.s32.totalorder %s24, 3
      %p79 = por %p77, %p78
      %p80 = scmp.ne.s32.totalorder %s72, %s75
      %p81 = scmp.eq.s32.totalorder %s24, 0
      %p82 = por %p80, %p81
      %p83 = scmp.ne.s32.totalorder %s72, %s75
      %p84 = scmp.eq.s32.totalorder %s29, 3
      %p85 = por %p83, %p84
      %p86 = scmp.ne.s32.totalorder %s75, %s76
      %p87 = scmp.eq.s32.totalorder %s29, 0
      %p88 = por %p86, %p87
      %p89 = scmp.ne.s32.totalorder %s75, %s76
      %p90 = scmp.eq.s32.totalorder %s30, 3
      %p91 = por %p89, %p90
      %p93 = scmp.ne.s32.totalorder %s76, %s92
      %p94 = scmp.eq.s32.totalorder %s30, 0
      %p95 = por %p93, %p94
      %s96 = ssub.s32 %s32, %s39
      %p97 = scmp.eq.s32.totalorder %s96, 0
      %s99 = sadd.s32 %s98, 1
      %s100 = scalar_select %p97, %s98, %s99
      %p103 = pneg %p97
      %p104 = scmp.eq.s32.totalorder %s24, 3
      %p105 = por %p103, %p104
      %p106 = scmp.ne.s32.totalorder %s98, %s101
      %p107 = scmp.eq.s32.totalorder %s24, 0
      %p108 = por %p106, %p107
      %p109 = scmp.ne.s32.totalorder %s98, %s101
      %p110 = scmp.eq.s32.totalorder %s29, 3
      %p111 = por %p109, %p110
      %p112 = scmp.ne.s32.totalorder %s101, %s102
      %p113 = scmp.eq.s32.totalorder %s29, 0
      %p114 = por %p112, %p113
      %p115 = scmp.ne.s32.totalorder %s101, %s102
      %p116 = scmp.eq.s32.totalorder %s30, 3
      %p117 = por %p115, %p116
      %p119 = scmp.ne.s32.totalorder %s102, %s118
      %p120 = scmp.eq.s32.totalorder %s30, 0
      %p121 = por %p119, %p120
      %s123 = sadd.s32 %s122, 1
      %p126 = scmp.eq.s32.totalorder %s24, 3
      %p127 = scmp.ne.s32.totalorder %s122, %s124
      %p128 = scmp.eq.s32.totalorder %s24, 0
      %p129 = por %p127, %p128
      %p130 = scmp.ne.s32.totalorder %s122, %s124
      %p131 = scmp.eq.s32.totalorder %s29, 3
      %p132 = por %p130, %p131
      %p133 = scmp.ne.s32.totalorder %s124, %s125
      %p134 = scmp.eq.s32.totalorder %s29, 0
      %p135 = por %p133, %p134
      %p136 = scmp.ne.s32.totalorder %s124, %s125
      %p137 = scmp.eq.s32.totalorder %s30, 3
      %p138 = por %p136, %p137
      %p140 = scmp.ne.s32.totalorder %s125, %s139
      %p141 = scmp.eq.s32.totalorder %s30, 0
      %p142 = por %p140, %p141
      %s144 = sadd.s32 %s143, 1
      %p147 = scmp.eq.s32.totalorder %s24, 3
      %p148 = scmp.ne.s32.totalorder %s143, %s145
      %p149 = scmp.eq.s32.totalorder %s24, 0
      %p150 = por %p148, %p149
      %p151 = scmp.ne.s32.totalorder %s143, %s145
      %p152 = scmp.eq.s32.totalorder %s29, 3
      %p153 = por %p151, %p152
      %p154 = scmp.ne.s32.totalorder %s145, %s146
      %p155 = scmp.eq.s32.totalorder %s29, 0
      %p156 = por %p154, %p155
      %p157 = scmp.ne.s32.totalorder %s145, %s146
      %p158 = scmp.eq.s32.totalorder %s30, 3
      %p159 = por %p157, %p158
      %p161 = scmp.ne.s32.totalorder %s146, %s160
      %p162 = scmp.eq.s32.totalorder %s30, 0
      %p163 = por %p161, %p162
      %s165 = sadd.s32 %s164, 1
      %p168 = scmp.eq.s32.totalorder %s24, 3
      %p169 = scmp.ne.s32.totalorder %s164, %s166
      %p170 = scmp.eq.s32.totalorder %s24, 0
      %p171 = por %p169, %p170
      %p172 = scmp.ne.s32.totalorder %s164, %s166
      %p173 = scmp.eq.s32.totalorder %s29, 3
      %p174 = por %p172, %p173
      %p175 = scmp.ne.s32.totalorder %s166, %s167
      %p176 = scmp.eq.s32.totalorder %s29, 0
      %p177 = por %p175, %p176
      %p178 = scmp.ne.s32.totalorder %s166, %s167
      %p179 = scmp.eq.s32.totalorder %s30, 3
      %p180 = por %p178, %p179
      %p182 = scmp.ne.s32.totalorder %s167, %s181
      %p183 = scmp.eq.s32.totalorder %s30, 0
      %p184 = por %p182, %p183
      %s186 = sadd.s32 %s185, 1
      %p189 = scmp.eq.s32.totalorder %s24, 3
      %p190 = scmp.ne.s32.totalorder %s185, %s187
      %p191 = scmp.eq.s32.totalorder %s24, 0
      %p192 = por %p190, %p191
      %p193 = scmp.ne.s32.totalorder %s185, %s187
      %p194 = scmp.eq.s32.totalorder %s29, 3
      %p195 = por %p193, %p194
      %p196 = scmp.ne.s32.totalorder %s187, %s188
      %p197 = scmp.eq.s32.totalorder %s29, 0
      %p198 = por %p196, %p197
      %p199 = scmp.ne.s32.totalorder %s187, %s188
      %p200 = scmp.eq.s32.totalorder %s30, 3
      %p201 = por %p199, %p200
      %p203 = scmp.ne.s32.totalorder %s188, %s202
      %p204 = scmp.eq.s32.totalorder %s30, 0
      %p205 = por %p203, %p204
      %s206 = ssub.s32 %s31, %s43
      %p207 = scmp.eq.s32.totalorder %s206, 0
      %s209 = sadd.s32 %s208, 1
      %s210 = scalar_select %p207, %s208, %s209
      %p213 = pneg %p207
      %p214 = scmp.eq.s32.totalorder %s24, 3
      %p215 = por %p213, %p214
      %p216 = scmp.ne.s32.totalorder %s208, %s211
      %p217 = scmp.eq.s32.totalorder %s24, 0
      %p218 = por %p216, %p217
      %p219 = scmp.ne.s32.totalorder %s208, %s211
      %p220 = scmp.eq.s32.totalorder %s29, 3
      %p221 = por %p219, %p220
      %p222 = scmp.ne.s32.totalorder %s211, %s212
      %p223 = scmp.eq.s32.totalorder %s29, 0
      %p224 = por %p222, %p223
      %p225 = scmp.ne.s32.totalorder %s211, %s212
      %p226 = scmp.eq.s32.totalorder %s30, 3
      %p227 = por %p225, %p226
      %p229 = scmp.ne.s32.totalorder %s212, %s228
      %p230 = scmp.eq.s32.totalorder %s30, 0
      %p231 = por %p229, %p230
      %p232 = scmp.le.s32.totalorder 1, %s24
      %p233 = scmp.lt.s32.totalorder %s24, 5
      %p234 = pnand %p232, %p233
      %p235 = pneg %p234
      // Predicated region
      $region9: #{tpu_custom_call.1} parent=5 // pred_check
        _
      $region10: #{tpu_custom_call.1} parent=5 // pred_check_branch
        %237 = sbr.rel (%p234) target = $region12
      $region11: #{tpu_custom_call.1} parent=5 // pred_region
        %s238 = ssub.s32 %s24, 1
        // Predicated region
        $region13: #{tpu_custom_call.1} parent=11 // pred_check
          %p239 = pneg %p135
        $region14: #{tpu_custom_call.1} parent=11 // pred_check_branch
          %241 = sbr.rel (%p239) target = $region16
        $region15: #{tpu_custom_call.1} parent=11 // pred_region
          %s243 = ssub.s32 128, 128
          %244 = vsyncadd [#allocation12], %s243
          %s245 = sshll.u32 [#allocation11], 4
          %s246 = int_to_ptr.vmem [resolvable:$true] %s245
          %251 = dma.hbm_to_vmem [thread:$0]  %s3, 128, %s246, [#allocation12], 64, 64, 4
        $region16: #{tpu_custom_call.1} parent=11 // pred_fallthru
          _
        // Predicated region
        $region17: #{tpu_custom_call.1} parent=11 // pred_check
          %p252 = pneg %p156
        $region18: #{tpu_custom_call.1} parent=11 // pred_check_branch
          %254 = sbr.rel (%p252) target = $region20
        $region19: #{tpu_custom_call.1} parent=11 // pred_region
          %s256 = ssub.s32 128, 128
          %257 = vsyncadd [#allocation12], %s256
          %s258 = sshll.u32 [#allocation13], 4
          %s259 = int_to_ptr.vmem [resolvable:$true] %s258
          %264 = dma.hbm_to_vmem [thread:$0]  %s4, 128, %s259, [#allocation12], 64, 64, 4
        $region20: #{tpu_custom_call.1} parent=11 // pred_fallthru
          _
        // Predicated region
        $region21: #{tpu_custom_call.1} parent=11 // pred_check
          %p265 = pneg %p177
        $region22: #{tpu_custom_call.1} parent=11 // pred_check_branch
          %267 = sbr.rel (%p265) target = $region24
        $region23: #{tpu_custom_call.1} parent=11 // pred_region
          _
        $region24: #{tpu_custom_call.1} parent=11 // pred_fallthru
          _
        // Predicated region
        $region25: #{tpu_custom_call.1} parent=11 // pred_check
          %p268 = pneg %p198
        $region26: #{tpu_custom_call.1} parent=11 // pred_check_branch
          %270 = sbr.rel (%p268) target = $region28
        $region27: #{tpu_custom_call.1} parent=11 // pred_region
          %s272 = ssub.s32 128, 128
          %273 = vsyncadd [#allocation15], %s272
          %s274 = sshll.u32 [#allocation14], 4
          %s275 = int_to_ptr.vmem [resolvable:$true] %s274
          %280 = dma.hbm_to_vmem [thread:$0]  %s6, 128, %s275, [#allocation15], 64, 64, 4
        $region28: #{tpu_custom_call.1} parent=11 // pred_fallthru
          _
      $region12: #{tpu_custom_call.1} parent=5 // pred_fallthru
        _
      %p281 = scmp.lt.s32.totalorder %s24, 4
      // Predicated region
      $region29: #{tpu_custom_call.1} parent=5 // pred_check
        %p282 = pneg %p281
      $region30: #{tpu_custom_call.1} parent=5 // pred_check_branch
        %284 = sbr.rel (%p282) target = $region32
      $region31: #{tpu_custom_call.1} parent=5 // pred_region
        // Predicated region
        $region33: #{tpu_custom_call.1} parent=31 // pred_check
          %p285 = pneg %p56
        $region34: #{tpu_custom_call.1} parent=31 // pred_check_branch
          %287 = sbr.rel (%p285) target = $region36
        $region35: #{tpu_custom_call.1} parent=31 // pred_region
          %s288 = sand.u32 %s46, 1
          %s289 = scalar_lea.sflag [#allocation6], %s288
          %s290 = sand.u32 %s46, 1
          %s291 = smul.addr %s290, 8
          %s292 = scalar_lea.vmem [#allocation5], %s291
          %s294 = ssub.s32 128, 128
          %295 = vsyncadd %s289, %s294
          %s296 = smul.addr %s31, 2
          %s297 = smul.addr %s296, 64
          %s298 = scalar_lea.hbm %s0, %s297
          %s299 = sshll.u32 %s292, 4
          %s300 = int_to_ptr.vmem [resolvable:$true] %s299
          %305 = dma.hbm_to_vmem [thread:$0]  %s298, 128, %s300, %s289, 64, 64, 4
        $region36: #{tpu_custom_call.1} parent=31 // pred_fallthru
          _
        // Predicated region
        $region37: #{tpu_custom_call.1} parent=31 // pred_check
          %p306 = pneg %p82
        $region38: #{tpu_custom_call.1} parent=31 // pred_check_branch
          %308 = sbr.rel (%p306) target = $region40
        $region39: #{tpu_custom_call.1} parent=31 // pred_region
          %s309 = sand.u32 %s24, 1
          %s310 = scalar_lea.sflag [#allocation9], %s309
          %s311 = sand.u32 %s72, 1
          %s312 = smul.addr %s311, 256
          %s313 = scalar_lea.vmem [#allocation8], %s312
          %s315 = ssub.s32 4096, 4096
          %316 = vsyncadd %s310, %s315
          %s317 = smul.addr %s32, 64
          %s318 = smul.addr %s317, 64
          %s319 = scalar_lea.hbm %s1, %s318
          %s320 = sshll.u32 %s313, 4
          %s321 = int_to_ptr.vmem [resolvable:$true] %s320
          %326 = dma.hbm_to_vmem [thread:$0]  %s319, 4096, %s321, %s310, 256, 256, 16
        $region40: #{tpu_custom_call.1} parent=31 // pred_fallthru
          _
        // Predicated region
        $region41: #{tpu_custom_call.1} parent=31 // pred_check
          %p327 = pneg %p108
        $region42: #{tpu_custom_call.1} parent=31 // pred_check_branch
          %329 = sbr.rel (%p327) target = $region44
        $region43: #{tpu_custom_call.1} parent=31 // pred_region
          %s330 = sand.u32 %s24, 1
          %s331 = scalar_lea.sflag [#allocation9], %s330
          %s332 = sand.u32 %s98, 1
          %s333 = smul.addr %s332, 512
          %s334 = scalar_lea.vmem [#allocation10], %s333
          %s336 = ssub.s32 8192, 8192
          %337 = vsyncadd %s331, %s336
          %s338 = smul.addr %s32, 128
          %s339 = smul.addr %s338, 64
          %s340 = scalar_lea.hbm %s2, %s339
          %s341 = sshll.u32 %s334, 4
          %s342 = int_to_ptr.vmem [resolvable:$true] %s341
          %347 = dma.hbm_to_vmem [thread:$0]  %s340, 8192, %s342, %s331, 256, 256, 16
        $region44: #{tpu_custom_call.1} parent=31 // pred_fallthru
          _
      $region32: #{tpu_custom_call.1} parent=5 // pred_fallthru
        _
      %p348 = scmp.le.s32.totalorder 1, %s24
      %p349 = scmp.lt.s32.totalorder %s24, 5
      %p350 = pnand %p348, %p349
      %p351 = pneg %p350
      // Predicated region
      $region45: #{tpu_custom_call.1} parent=5 // pred_check
        _
      $region46: #{tpu_custom_call.1} parent=5 // pred_check_branch
        %353 = sbr.rel (%p350) target = $region48
      $region47: #{tpu_custom_call.1} parent=5 // pred_region
        %s354 = ssub.s32 %s24, 1
        %s355 = sand.u32 %s49, 1
        %s356 = scalar_lea.sflag [#allocation6], %s355
        %s357 = sand.u32 %s49, 1
        %s358 = smul.addr %s357, 8
        %s359 = scalar_lea.vmem [#allocation5], %s358
        // Predicated region
        $region49: #{tpu_custom_call.1} parent=47 // pred_check
          %p360 = pneg %p62
        $region50: #{tpu_custom_call.1} parent=47 // pred_check_branch
          %362 = sbr.rel (%p360) target = $region52
        $region51: #{tpu_custom_call.1} parent=47 // pred_region
          %363 = dma.done %s356, 128
        $region52: #{tpu_custom_call.1} parent=47 // pred_fallthru
          _
        %s364 = sand.u32 %s29, 1
        %s365 = scalar_lea.sflag [#allocation9], %s364
        %s366 = sand.u32 %s75, 1
        %s367 = smul.addr %s366, 256
        %s368 = scalar_lea.vmem [#allocation8], %s367
        // Predicated region
        $region53: #{tpu_custom_call.1} parent=47 // pred_check
          %p369 = pneg %p88
        $region54: #{tpu_custom_call.1} parent=47 // pred_check_branch
          %371 = sbr.rel (%p369) target = $region56
        $region55: #{tpu_custom_call.1} parent=47 // pred_region
          %372 = dma.done %s365, 4096
        $region56: #{tpu_custom_call.1} parent=47 // pred_fallthru
          _
        %s373 = sand.u32 %s29, 1
        %s374 = scalar_lea.sflag [#allocation9], %s373
        %s375 = sand.u32 %s101, 1
        %s376 = smul.addr %s375, 512
        %s377 = scalar_lea.vmem [#allocation10], %s376
        // Predicated region
        $region57: #{tpu_custom_call.1} parent=47 // pred_check
          %p378 = pneg %p114
        $region58: #{tpu_custom_call.1} parent=47 // pred_check_branch
          %380 = sbr.rel (%p378) target = $region60
        $region59: #{tpu_custom_call.1} parent=47 // pred_region
          %381 = dma.done %s374, 8192
        $region60: #{tpu_custom_call.1} parent=47 // pred_fallthru
          _
        // Predicated region
        $region61: #{tpu_custom_call.1} parent=47 // pred_check
          %p382 = pneg %p135
        $region62: #{tpu_custom_call.1} parent=47 // pred_check_branch
          %384 = sbr.rel (%p382) target = $region64
        $region63: #{tpu_custom_call.1} parent=47 // pred_region
          %385 = dma.done [#allocation12], 128
        $region64: #{tpu_custom_call.1} parent=47 // pred_fallthru
          _
        // Predicated region
        $region65: #{tpu_custom_call.1} parent=47 // pred_check
          %p386 = pneg %p156
        $region66: #{tpu_custom_call.1} parent=47 // pred_check_branch
          %388 = sbr.rel (%p386) target = $region68
        $region67: #{tpu_custom_call.1} parent=47 // pred_region
          %389 = dma.done [#allocation12], 128
        $region68: #{tpu_custom_call.1} parent=47 // pred_fallthru
          _
        // Predicated region
        $region69: #{tpu_custom_call.1} parent=47 // pred_check
          %p390 = pneg %p198
        $region70: #{tpu_custom_call.1} parent=47 // pred_check_branch
          %392 = sbr.rel (%p390) target = $region72
        $region71: #{tpu_custom_call.1} parent=47 // pred_region
          %393 = dma.done [#allocation15], 128
        $region72: #{tpu_custom_call.1} parent=47 // pred_fallthru
          _
        %s394 = sand.u32 %s49, 1
        %s395 = scalar_lea.sflag [#allocation6], %s394
        %s396 = sand.u32 %s49, 1
        %s397 = smul.addr %s396, 8
        %s398 = scalar_lea.vmem [#allocation5], %s397
        %p399 = pneg %p62
        %p400 = pneg %p59
        %s401 = sand.u32 %s29, 1
        %s402 = scalar_lea.sflag [#allocation9], %s401
        %s403 = sand.u32 %s75, 1
        %s404 = smul.addr %s403, 256
        %s405 = scalar_lea.vmem [#allocation8], %s404
        %p406 = pneg %p88
        %p407 = pneg %p85
        %s408 = sand.u32 %s29, 1
        %s409 = scalar_lea.sflag [#allocation9], %s408
        %s410 = sand.u32 %s101, 1
        %s411 = smul.addr %s410, 512
        %s412 = scalar_lea.vmem [#allocation10], %s411
        %p413 = pneg %p114
        %p414 = pneg %p111
        %p415 = pneg %p135
        %p416 = pneg %p132
        %p417 = pneg %p156
        %p418 = pneg %p153
        %p419 = pneg %p177
        %p420 = pneg %p174
        %p421 = pneg %p198
        %p422 = pneg %p195
        %p423 = pneg %p224
        %p424 = pneg %p221
        %s425 = sand.u32 %s211, 1
        %s426 = scalar_lea.sflag [#allocation7], %s425
        %s427 = sand.u32 %s211, 1
        %s428 = smul.addr %s427, 64
        %s429 = scalar_lea.vmem [#allocation16], %s428
        %p431 = scmp.eq.s32.totalorder %s34, 0
        // Predicated region
        $region73: #{tpu_custom_call.1} parent=47 // pred_check
          %p432 = pneg %p431
        $region74: #{tpu_custom_call.1} parent=47 // pred_check_branch
          %434 = sbr.rel (%p432) target = $region76
        $region75: #{tpu_custom_call.1} parent=47 // pred_region
          %435 = vst [vmem:[#allocation2] sm:$0xff] 0.0
          %436 = vst [vmem:[#allocation2 + $0x8] sm:$0xff] 0.0
          %437 = vst [vmem:[#allocation2 + $0x10] sm:$0xff] 0.0
          %438 = vst [vmem:[#allocation2 + $0x18] sm:$0xff] 0.0
          %439 = vst [vmem:[#allocation2 + $0x20] sm:$0xff] 0.0
          %440 = vst [vmem:[#allocation2 + $0x28] sm:$0xff] 0.0
          %441 = vst [vmem:[#allocation2 + $0x30] sm:$0xff] 0.0
          %442 = vst [vmem:[#allocation2 + $0x38] sm:$0xff] 0.0
        $region76: #{tpu_custom_call.1} parent=47 // pred_fallthru
          _
        %v443 = vld [vmem:[%s359] sm:$0xf]
        %v444 = vld [vmem:[%s359 + $0x4] sm:$0xf]
        %v445 = vld [vmem:[%s368] sm:$0xff]
        %v446 = vld [vmem:[%s368 + $0x8] sm:$0xff]
        %v447 = vld [vmem:[%s368 + $0x10] sm:$0xff]
        %v448 = vld [vmem:[%s368 + $0x18] sm:$0xff]
        %v449 = vld [vmem:[%s368 + $0x20] sm:$0xff]
        %v450 = vld [vmem:[%s368 + $0x28] sm:$0xff]
        %v451 = vld [vmem:[%s368 + $0x30] sm:$0xff]
        %v452 = vld [vmem:[%s368 + $0x38] sm:$0xff]
        %v453 = vld [vmem:[%s368 + $0x40] sm:$0xff]
        %v454 = vld [vmem:[%s368 + $0x48] sm:$0xff]
        %v455 = vld [vmem:[%s368 + $0x50] sm:$0xff]
        %v456 = vld [vmem:[%s368 + $0x58] sm:$0xff]
        %v457 = vld [vmem:[%s368 + $0x60] sm:$0xff]
        %v458 = vld [vmem:[%s368 + $0x68] sm:$0xff]
        %v459 = vld [vmem:[%s368 + $0x70] sm:$0xff]
        %v460 = vld [vmem:[%s368 + $0x78] sm:$0xff]
        %v461 = vld [vmem:[%s368 + $0x80] sm:$0xff]
        %v462 = vld [vmem:[%s368 + $0x88] sm:$0xff]
        %v463 = vld [vmem:[%s368 + $0x90] sm:$0xff]
        %v464 = vld [vmem:[%s368 + $0x98] sm:$0xff]
        %v465 = vld [vmem:[%s368 + $0xa0] sm:$0xff]
        %v466 = vld [vmem:[%s368 + $0xa8] sm:$0xff]
        %v467 = vld [vmem:[%s368 + $0xb0] sm:$0xff]
        %v468 = vld [vmem:[%s368 + $0xb8] sm:$0xff]
        %v469 = vld [vmem:[%s368 + $0xc0] sm:$0xff]
        %v470 = vld [vmem:[%s368 + $0xc8] sm:$0xff]
        %v471 = vld [vmem:[%s368 + $0xd0] sm:$0xff]
        %v472 = vld [vmem:[%s368 + $0xd8] sm:$0xff]
        %v473 = vld [vmem:[%s368 + $0xe0] sm:$0xff]
        %v474 = vld [vmem:[%s368 + $0xe8] sm:$0xff]
        %v475 = vld [vmem:[%s368 + $0xf0] sm:$0xff]
        %v476 = vld [vmem:[%s368 + $0xf8] sm:$0xff]
        %v479 = vunpack.c.l.b16 %v443
        %v480 = vunpack.c.l.b16 %v444
        %v481 = vpack.c.b16 %v480, %v479
        %v515 = vunpack.c.l.b16 %v445
        %v516 = vunpack.c.h.b16 %v445
        %v517 = vunpack.c.l.b16 %v446
        %v518 = vunpack.c.h.b16 %v446
        %v519 = vunpack.c.l.b16 %v447
        %v520 = vunpack.c.h.b16 %v447
        %v521 = vunpack.c.l.b16 %v448
        %v522 = vunpack.c.h.b16 %v448
        %v523 = vunpack.c.l.b16 %v449
        %v524 = vunpack.c.h.b16 %v449
        %v525 = vunpack.c.l.b16 %v450
        %v526 = vunpack.c.h.b16 %v450
        %v527 = vunpack.c.l.b16 %v451
        %v528 = vunpack.c.h.b16 %v451
        %v529 = vunpack.c.l.b16 %v452
        %v530 = vunpack.c.h.b16 %v452
        %v531 = vunpack.c.l.b16 %v453
        %v532 = vunpack.c.h.b16 %v453
        %v533 = vunpack.c.l.b16 %v454
        %v534 = vunpack.c.h.b16 %v454
        %v535 = vunpack.c.l.b16 %v455
        %v536 = vunpack.c.h.b16 %v455
        %v537 = vunpack.c.l.b16 %v456
        %v538 = vunpack.c.h.b16 %v456
        %v539 = vunpack.c.l.b16 %v457
        %v540 = vunpack.c.h.b16 %v457
        %v541 = vunpack.c.l.b16 %v458
        %v542 = vunpack.c.h.b16 %v458
        %v543 = vunpack.c.l.b16 %v459
        %v544 = vunpack.c.h.b16 %v459
        %v545 = vunpack.c.l.b16 %v460
        %v546 = vunpack.c.h.b16 %v460
        %v547 = vunpack.c.l.b16 %v461
        %v548 = vunpack.c.h.b16 %v461
        %v549 = vunpack.c.l.b16 %v462
        %v550 = vunpack.c.h.b16 %v462
        %v551 = vunpack.c.l.b16 %v463
        %v552 = vunpack.c.h.b16 %v463
        %v553 = vunpack.c.l.b16 %v464
        %v554 = vunpack.c.h.b16 %v464
        %v555 = vunpack.c.l.b16 %v465
        %v556 = vunpack.c.h.b16 %v465
        %v557 = vunpack.c.l.b16 %v466
        %v558 = vunpack.c.h.b16 %v466
        %v559 = vunpack.c.l.b16 %v467
        %v560 = vunpack.c.h.b16 %v467
        %v561 = vunpack.c.l.b16 %v468
        %v562 = vunpack.c.h.b16 %v468
        %v563 = vunpack.c.l.b16 %v469
        %v564 = vunpack.c.h.b16 %v469
        %v565 = vunpack.c.l.b16 %v470
        %v566 = vunpack.c.h.b16 %v470
        %v567 = vunpack.c.l.b16 %v471
        %v568 = vunpack.c.h.b16 %v471
        %v569 = vunpack.c.l.b16 %v472
        %v570 = vunpack.c.h.b16 %v472
        %v571 = vunpack.c.l.b16 %v473
        %v572 = vunpack.c.h.b16 %v473
        %v573 = vunpack.c.l.b16 %v474
        %v574 = vunpack.c.h.b16 %v474
        %v575 = vunpack.c.l.b16 %v475
        %v576 = vunpack.c.h.b16 %v475
        %v577 = vunpack.c.l.b16 %v476
        %v578 = vunpack.c.h.b16 %v476
        %v579 = vpack.c.b16 %v519, %v515
        %v580 = vpack.c.b16 %v520, %v516
        %v581 = vpack.c.b16 %v521, %v517
        %v582 = vpack.c.b16 %v522, %v518
        %v583 = vpack.c.b16 %v527, %v523
        %v584 = vpack.c.b16 %v528, %v524
        %v585 = vpack.c.b16 %v529, %v525
        %v586 = vpack.c.b16 %v530, %v526
        %v587 = vpack.c.b16 %v535, %v531
        %v588 = vpack.c.b16 %v536, %v532
        %v589 = vpack.c.b16 %v537, %v533
        %v590 = vpack.c.b16 %v538, %v534
        %v591 = vpack.c.b16 %v543, %v539
        %v592 = vpack.c.b16 %v544, %v540
        %v593 = vpack.c.b16 %v545, %v541
        %v594 = vpack.c.b16 %v546, %v542
        %v595 = vpack.c.b16 %v551, %v547
        %v596 = vpack.c.b16 %v552, %v548
        %v597 = vpack.c.b16 %v553, %v549
        %v598 = vpack.c.b16 %v554, %v550
        %v599 = vpack.c.b16 %v559, %v555
        %v600 = vpack.c.b16 %v560, %v556
        %v601 = vpack.c.b16 %v561, %v557
        %v602 = vpack.c.b16 %v562, %v558
        %v603 = vpack.c.b16 %v567, %v563
        %v604 = vpack.c.b16 %v568, %v564
        %v605 = vpack.c.b16 %v569, %v565
        %v606 = vpack.c.b16 %v570, %v566
        %v607 = vpack.c.b16 %v575, %v571
        %v608 = vpack.c.b16 %v576, %v572
        %v609 = vpack.c.b16 %v577, %v573
        %v610 = vpack.c.b16 %v578, %v574
        %643 = vmatprep.subr.bf16.mxu0 %v608
        %644 = vmatpush1.bf16.msra.mxu0 %v607
        %645 = vmatprep.subr.bf16.mxu0 %v604
        %646 = vmatpush1.bf16.msra.mxu0 %v603
        %647 = vmatprep.subr.bf16.mxu0 %v600
        %648 = vmatpush1.bf16.msra.mxu0 %v599
        %649 = vmatprep.subr.bf16.mxu0 %v596
        %650 = vmatpush1.bf16.msra.mxu0 %v595
        %651 = vmatprep.subr.bf16.mxu0 %v592
        %652 = vmatpush1.bf16.msra.mxu0 %v591
        %653 = vmatprep.subr.bf16.mxu0 %v588
        %654 = vmatpush1.bf16.msra.mxu0 %v587
        %655 = vmatprep.subr.bf16.mxu0 %v584
        %656 = vmatpush1.bf16.msra.mxu0 %v583
        %657 = vmatprep.subr.bf16.mxu0 %v580
        %658 = vmatpush1.bf16.msra.mxu0 %v579
        %659 = vmatprep.subr.bf16.mxu0 0
        %660 = vmatpush2.bf16.msra.mxu0 0
        %661 = vmatprep.subr.bf16.mxu0 0
        %662 = vmatpush2.bf16.msra.mxu0 0
        %663 = vmatprep.subr.bf16.mxu0 0
        %664 = vmatpush2.bf16.msra.mxu0 0
        %665 = vmatprep.subr.bf16.mxu0 0
        %666 = vmatpush2.bf16.msra.mxu0 0
        %667 = vmatprep.subr.bf16.mxu0 0
        %668 = vmatpush2.bf16.msra.mxu0 0
        %669 = vmatprep.subr.bf16.mxu0 0
        %670 = vmatpush2.bf16.msra.mxu0 0
        %671 = vmatprep.subr.bf16.mxu0 0
        %672 = vmatpush2.bf16.msra.mxu0 0
        %673 = vmatprep.subr.bf16.mxu0 0
        %674 = vmatpush2.bf16.msra.mxu0 0
        %675 = vmatprep.mubr.bf16.mxu0 0
        %676 = vmatmul.mubr.bf16.gmra.mxu0 %v481
        %v677 = vpop.f32.mrf.mxu0
        %v678 = vadd.f32 0.0, %v677
        %v679 = vpop.f32.mrf.mxu0
        %v680 = vadd.f32 0.0, %v679
        %v681 = vpop.f32.mrf.mxu0
        %v682 = vadd.f32 0.0, %v681
        %v683 = vpop.f32.mrf.mxu0
        %v684 = vadd.f32 0.0, %v683
        %685 = vdwg.mxu0
        %686 = vmatprep.subr.bf16.mxu0 %v610
        %687 = vmatpush1.bf16.msra.mxu0 %v609
        %688 = vmatprep.subr.bf16.mxu0 %v606
        %689 = vmatpush1.bf16.msra.mxu0 %v605
        %690 = vmatprep.subr.bf16.mxu0 %v602
        %691 = vmatpush1.bf16.msra.mxu0 %v601
        %692 = vmatprep.subr.bf16.mxu0 %v598
        %693 = vmatpush1.bf16.msra.mxu0 %v597
        %694 = vmatprep.subr.bf16.mxu0 %v594
        %695 = vmatpush1.bf16.msra.mxu0 %v593
        %696 = vmatprep.subr.bf16.mxu0 %v590
        %697 = vmatpush1.bf16.msra.mxu0 %v589
        %698 = vmatprep.subr.bf16.mxu0 %v586
        %699 = vmatpush1.bf16.msra.mxu0 %v585
        %700 = vmatprep.subr.bf16.mxu0 %v582
        %701 = vmatpush1.bf16.msra.mxu0 %v581
        %702 = vmatprep.subr.bf16.mxu0 0
        %703 = vmatpush2.bf16.msra.mxu0 0
        %704 = vmatprep.subr.bf16.mxu0 0
        %705 = vmatpush2.bf16.msra.mxu0 0
        %706 = vmatprep.subr.bf16.mxu0 0
        %707 = vmatpush2.bf16.msra.mxu0 0
        %708 = vmatprep.subr.bf16.mxu0 0
        %709 = vmatpush2.bf16.msra.mxu0 0
        %710 = vmatprep.subr.bf16.mxu0 0
        %711 = vmatpush2.bf16.msra.mxu0 0
        %712 = vmatprep.subr.bf16.mxu0 0
        %713 = vmatpush2.bf16.msra.mxu0 0
        %714 = vmatprep.subr.bf16.mxu0 0
        %715 = vmatpush2.bf16.msra.mxu0 0
        %716 = vmatprep.subr.bf16.mxu0 0
        %717 = vmatpush2.bf16.msra.mxu0 0
        %718 = vmatprep.mubr.bf16.mxu0 0
        %719 = vmatmul.mubr.bf16.gmra.mxu0 %v481
        %v720 = vpop.f32.mrf.mxu0
        %v721 = vadd.f32 0.0, %v720
        %v722 = vpop.f32.mrf.mxu0
        %v723 = vadd.f32 0.0, %v722
        %v724 = vpop.f32.mrf.mxu0
        %v725 = vadd.f32 0.0, %v724
        %v726 = vpop.f32.mrf.mxu0
        %v727 = vadd.f32 0.0, %v726
        %728 = vdwg.mxu0
        %v729 = vld [vmem:[%s5] sm:$0xf]
        %v730 = vld [vmem:[%s5 + $0x4] sm:$0xf]
        %v731 = vunpack.c.l.bf16 %v729
        %v732 = vunpack.c.l.bf16 %v730
        %v733 = vmul.f32 %v721, %v731
        %v734 = vmul.f32 %v725, %v732
        %735 = vrot.lane.b32.xlu0 %v721, 64
        %v736 = vpop.permute.xlu0 %735
        %737 = vrot.lane.b32.xlu0 %v725, 64
        %v738 = vpop.permute.xlu0 %737
        %v739 = vld [vmem:[#allocation14] sm:$0xf]
        %v740 = vld [vmem:[#allocation14 + $0x4] sm:$0xf]
        %v741 = vunpack.c.l.bf16 %v739
        %v742 = vunpack.c.l.bf16 %v740
        %v743 = vmul.f32 %v736, %v741
        %v744 = vmul.f32 %v738, %v742
        %v745 = vadd.f32 %v733, %v743
        %v746 = vadd.f32 %v734, %v744
        %v747 = vpack.c.bf16 %v746, %v745
        %v748 = vpack.c.bf16 %v727, %v723
        %v749 = vld [vmem:[#allocation11] sm:$0xf]
        %v750 = vld [vmem:[#allocation11 + $0x4] sm:$0xf]
        %v751 = vunpack.c.l.bf16 %v749
        %v752 = vunpack.c.l.bf16 %v750
        %v753 = vmul.f32 %v678, %v751
        %v754 = vmul.f32 %v682, %v752
        %755 = vrot.lane.b32.xlu0 %v678, 64
        %v756 = vpop.permute.xlu0 %755
        %757 = vrot.lane.b32.xlu0 %v682, 64
        %v758 = vpop.permute.xlu0 %757
        %v759 = vld [vmem:[#allocation13] sm:$0xf]
        %v760 = vld [vmem:[#allocation13 + $0x4] sm:$0xf]
        %v761 = vunpack.c.l.bf16 %v759
        %v762 = vunpack.c.l.bf16 %v760
        %v763 = vmul.f32 %v756, %v761
        %v764 = vmul.f32 %v758, %v762
        %v765 = vadd.f32 %v753, %v763
        %v766 = vadd.f32 %v754, %v764
        %v767 = vpack.c.bf16 %v766, %v765
        %v769 = vunpack.c.l.b16 %v767
        %v770 = vunpack.c.h.b16 %v767
        %v771 = vpack.c.b16 %v769, %v769
        %v772 = vpack.c.b16 %v770, %v770
        %775 = vst [vmem:[#allocation3] sm:$0xf] %v771
        %776 = vst [vmem:[#allocation3 + $0x4] sm:$0xf] %v772
        %v777 = vld [vmem:[#allocation11] sm:$0xf]
        %v778 = vld [vmem:[#allocation11 + $0x4] sm:$0xf]
        %v779 = vunpack.c.l.bf16 %v777
        %v780 = vunpack.c.l.bf16 %v778
        %v781 = vmul.f32 %v680, %v779
        %v782 = vmul.f32 %v684, %v780
        %783 = vrot.lane.b32.xlu0 %v680, 64
        %v784 = vpop.permute.xlu0 %783
        %785 = vrot.lane.b32.xlu0 %v684, 64
        %v786 = vpop.permute.xlu0 %785
        %v787 = vld [vmem:[#allocation13] sm:$0xf]
        %v788 = vld [vmem:[#allocation13 + $0x4] sm:$0xf]
        %v789 = vunpack.c.l.bf16 %v787
        %v790 = vunpack.c.l.bf16 %v788
        %v791 = vmul.f32 %v784, %v789
        %v792 = vmul.f32 %v786, %v790
        %v793 = vadd.f32 %v781, %v791
        %v794 = vadd.f32 %v782, %v792
        %v795 = vpack.c.bf16 %v794, %v793
        %v797 = vunpack.c.l.b16 %v795
        %v798 = vunpack.c.h.b16 %v795
        %v799 = vpack.c.b16 %v797, %v797
        %v800 = vpack.c.b16 %v798, %v798
        %803 = vst [vmem:[#allocation3 + $0x8] sm:$0xf] %v799
        %804 = vst [vmem:[#allocation3 + $0xc] sm:$0xf] %v800
        %v805 = vld [vmem:[#allocation3] sm:$0xf]
        %v806 = vld [vmem:[#allocation3 + $0x4] sm:$0xf]
        %v807 = vld [vmem:[#allocation3 + $0x8] sm:$0xf]
        %v808 = vld [vmem:[#allocation3 + $0xc] sm:$0xf]
        %v813 = vunpack.c.l.b16 %v805
        %v814 = vunpack.c.l.b16 %v806
        %v815 = vunpack.c.l.b16 %v807
        %v816 = vunpack.c.l.b16 %v808
        %v817 = vpack.c.b16 %v814, %v813
        %v818 = vpack.c.b16 %v816, %v815
        %821 = vmatprep.subr.bf16.mxu0 0
        %822 = vmatpush1.bf16.xpose.msra.mxu0 0
        %823 = vmatprep.subr.bf16.mxu0 0
        %824 = vmatpush1.bf16.xpose.msra.mxu0 0
        %825 = vmatprep.subr.bf16.mxu0 0
        %826 = vmatpush1.bf16.xpose.msra.mxu0 0
        %827 = vmatprep.subr.bf16.mxu0 0
        %828 = vmatpush1.bf16.xpose.msra.mxu0 0
        %829 = vmatprep.subr.bf16.mxu0 0
        %830 = vmatpush1.bf16.xpose.msra.mxu0 0
        %831 = vmatprep.subr.bf16.mxu0 0
        %832 = vmatpush1.bf16.xpose.msra.mxu0 0
        %833 = vmatprep.subr.bf16.mxu0 0
        %834 = vmatpush1.bf16.xpose.msra.mxu0 0
        %835 = vmatprep.subr.bf16.mxu0 0
        %836 = vmatpush1.bf16.xpose.msra.mxu0 %v747
        %837 = vmatprep.subr.bf16.mxu0 0
        %838 = vmatpush2.bf16.xpose.msra.mxu0 0
        %839 = vmatprep.subr.bf16.mxu0 0
        %840 = vmatpush2.bf16.xpose.msra.mxu0 0
        %841 = vmatprep.subr.bf16.mxu0 0
        %842 = vmatpush2.bf16.xpose.msra.mxu0 0
        %843 = vmatprep.subr.bf16.mxu0 0
        %844 = vmatpush2.bf16.xpose.msra.mxu0 0
        %845 = vmatprep.subr.bf16.mxu0 0
        %846 = vmatpush2.bf16.xpose.msra.mxu0 0
        %847 = vmatprep.subr.bf16.mxu0 0
        %848 = vmatpush2.bf16.xpose.msra.mxu0 0
        %849 = vmatprep.subr.bf16.mxu0 0
        %850 = vmatpush2.bf16.xpose.msra.mxu0 0
        %851 = vmatprep.subr.bf16.mxu0 0
        %852 = vmatpush2.bf16.xpose.msra.mxu0 0
        %853 = vmatprep.mubr.bf16.mxu0 0
        %854 = vmatmul.mubr.bf16.gmra.mxu0 %v817
        %v855 = vpop.f32.mrf.mxu0
        %v856 = vadd.f32 0.0, %v855
        %v857 = vpop.f32.mrf.mxu0
        %v858 = vpop.f32.mrf.mxu0
        %v859 = vadd.f32 0.0, %v858
        %v860 = vpop.f32.mrf.mxu0
        %861 = vmatprep.mubr.bf16.mxu0 0
        %862 = vmatmul.mubr.bf16.gmra.mxu0 %v818
        %v863 = vpop.f32.mrf.mxu0
        %v864 = vadd.f32 0.0, %v863
        %v865 = vpop.f32.mrf.mxu0
        %v866 = vpop.f32.mrf.mxu0
        %v867 = vadd.f32 0.0, %v866
        %v868 = vpop.f32.mrf.mxu0
        %869 = vdwg.mxu0
        %v870 = vlaneseq
        %v871 = vshrl.u32 %v870, 7
        %v872 = vadd.s32 %v871, 8
        %v873 = vlaneseq
        %v874 = vand.u32 %v873, 127
        %vm875 = vcmp.le.s32.totalorder %v874, %v871
        %vm876 = vcmp.le.s32.totalorder %v874, %v872
        %v877 = vsel %vm875, %v856, -1e+30
        %v878 = vsel %vm876, %v859, -1e+30
        %v879 = vsel %vm875, %v864, -1e+30
        %v880 = vsel %vm876, %v867, -1e+30
        %vm881 = vcmask 130048
        %v882 = vsel %vm881, %v877, -inf
        %883 = vmax.xlane.f32.xlu0 %v882
        %v884 = vpop.xlane.xlu0 %883
        %v885 = vsel %vm881, %v878, -inf
        %886 = vmax.xlane.f32.xlu0 %v885
        %v887 = vpop.xlane.xlu0 %886
        %v888 = vsel %vm881, %v879, -inf
        %889 = vmax.xlane.f32.xlu0 %v888
        %v890 = vpop.xlane.xlu0 %889
        %v891 = vsel %vm881, %v880, -inf
        %892 = vmax.xlane.f32.xlu0 %v891
        %v893 = vpop.xlane.xlu0 %892
        %v894 = vsub.f32 %v877, %v884
        %v895 = vsub.f32 %v878, %v887
        %v896 = vsub.f32 %v879, %v890
        %v897 = vsub.f32 %v880, %v893
        %v898 = vmul.f32 %v894, 1.442695
        %v899 = vpow.pop %v898
        %v900 = vmul.f32 %v895, 1.442695
        %v901 = vpow.pop %v900
        %v902 = vmul.f32 %v896, 1.442695
        %v903 = vpow.pop %v902
        %v904 = vmul.f32 %v897, 1.442695
        %v905 = vpow.pop %v904
        %v906 = vsel %vm881, %v899, 0.0
        %907 = vadd.xlane.f32.xlu0 %v906
        %v908 = vpop.xlane.xlu0 %907
        %v909 = vsel %vm881, %v901, 0.0
        %910 = vadd.xlane.f32.xlu0 %v909
        %v911 = vpop.xlane.xlu0 %910
        %v912 = vsel %vm881, %v903, 0.0
        %913 = vadd.xlane.f32.xlu0 %v912
        %v914 = vpop.xlane.xlu0 %913
        %v915 = vsel %vm881, %v905, 0.0
        %916 = vadd.xlane.f32.xlu0 %v915
        %v917 = vpop.xlane.xlu0 %916
        %v918 = vrcp.pop %v908
        %v919 = vrcp.pop %v911
        %v920 = vrcp.pop %v914
        %v921 = vrcp.pop %v917
        %v922 = vmul.f32 %v899, %v918
        %v923 = vmul.f32 %v901, %v919
        %v924 = vmul.f32 %v903, %v920
        %v925 = vmul.f32 %v905, %v921
        %v926 = vpack.c.bf16 %v923, %v922
        %v927 = vpack.c.bf16 %v925, %v924
        %v929 = vsel %vm881, %v926, 0
        %v932 = vsel %vm881, %v927, 0
        %934 = vmatprep.subr.bf16.mxu0 0
        %935 = vmatpush1.bf16.msra.mxu0 0
        %936 = vmatprep.subr.bf16.mxu0 0
        %937 = vmatpush1.bf16.msra.mxu0 0
        %938 = vmatprep.subr.bf16.mxu0 0
        %939 = vmatpush1.bf16.msra.mxu0 0
        %940 = vmatprep.subr.bf16.mxu0 0
        %941 = vmatpush1.bf16.msra.mxu0 0
        %942 = vmatprep.subr.bf16.mxu0 0
        %943 = vmatpush1.bf16.msra.mxu0 0
        %944 = vmatprep.subr.bf16.mxu0 0
        %945 = vmatpush1.bf16.msra.mxu0 0
        %946 = vmatprep.subr.bf16.mxu0 0
        %947 = vmatpush1.bf16.msra.mxu0 0
        %948 = vmatprep.subr.bf16.mxu0 0
        %949 = vmatpush1.bf16.msra.mxu0 %v748
        %950 = vmatprep.subr.bf16.mxu0 0
        %951 = vmatpush2.bf16.msra.mxu0 0
        %952 = vmatprep.subr.bf16.mxu0 0
        %953 = vmatpush2.bf16.msra.mxu0 0
        %954 = vmatprep.subr.bf16.mxu0 0
        %955 = vmatpush2.bf16.msra.mxu0 0
        %956 = vmatprep.subr.bf16.mxu0 0
        %957 = vmatpush2.bf16.msra.mxu0 0
        %958 = vmatprep.subr.bf16.mxu0 0
        %959 = vmatpush2.bf16.msra.mxu0 0
        %960 = vmatprep.subr.bf16.mxu0 0
        %961 = vmatpush2.bf16.msra.mxu0 0
        %962 = vmatprep.subr.bf16.mxu0 0
        %963 = vmatpush2.bf16.msra.mxu0 0
        %964 = vmatprep.subr.bf16.mxu0 0
        %965 = vmatpush2.bf16.msra.mxu0 0
        %966 = vmatprep.mubr.bf16.mxu0 0
        %967 = vmatmul.mubr.bf16.gmra.mxu0 %v929
        %v968 = vpop.f32.mrf.mxu0
        %v969 = vadd.f32 0.0, %v968
        %v970 = vpop.f32.mrf.mxu0
        %v971 = vpop.f32.mrf.mxu0
        %v972 = vadd.f32 0.0, %v971
        %v973 = vpop.f32.mrf.mxu0
        %974 = vmatprep.mubr.bf16.mxu0 0
        %975 = vmatmul.mubr.bf16.gmra.mxu0 %v932
        %v976 = vpop.f32.mrf.mxu0
        %v977 = vadd.f32 0.0, %v976
        %v978 = vpop.f32.mrf.mxu0
        %v979 = vpop.f32.mrf.mxu0
        %v980 = vadd.f32 0.0, %v979
        %v981 = vpop.f32.mrf.mxu0
        %982 = vdwg.mxu0
        %v983 = vpack.c.bf16 %v972, %v969
        %v985 = vunpack.c.l.b16 %v983
        %v986 = vunpack.c.h.b16 %v983
        %v987 = vpack.c.b16 %v985, %v985
        %v988 = vpack.c.b16 %v986, %v986
        %991 = vst [vmem:[#allocation4] sm:$0xf] %v987
        %992 = vst [vmem:[#allocation4 + $0x8] sm:$0xf] %v988
        %v993 = vpack.c.bf16 %v980, %v977
        %v995 = vunpack.c.l.b16 %v993
        %v996 = vunpack.c.h.b16 %v993
        %v997 = vpack.c.b16 %v995, %v995
        %v998 = vpack.c.b16 %v996, %v996
        %1001 = vst [vmem:[#allocation4 + $0x4] sm:$0xf] %v997
        %1002 = vst [vmem:[#allocation4 + $0xc] sm:$0xf] %v998
        %v1003 = vld [vmem:[#allocation2] sm:$0xff]
        %v1004 = vld [vmem:[#allocation2 + $0x8] sm:$0xff]
        %v1005 = vld [vmem:[#allocation2 + $0x10] sm:$0xff]
        %v1006 = vld [vmem:[#allocation2 + $0x18] sm:$0xff]
        %v1007 = vld [vmem:[#allocation2 + $0x20] sm:$0xff]
        %v1008 = vld [vmem:[#allocation2 + $0x28] sm:$0xff]
        %v1009 = vld [vmem:[#allocation2 + $0x30] sm:$0xff]
        %v1010 = vld [vmem:[#allocation2 + $0x38] sm:$0xff]
        %v1011 = vld [vmem:[#allocation4] sm:$0xff]
        %v1012 = vld [vmem:[#allocation4 + $0x8] sm:$0xff]
        %v1013 = vld [vmem:[%s377] sm:$0xff]
        %v1014 = vld [vmem:[%s377 + $0x8] sm:$0xff]
        %v1015 = vld [vmem:[%s377 + $0x10] sm:$0xff]
        %v1016 = vld [vmem:[%s377 + $0x18] sm:$0xff]
        %v1017 = vld [vmem:[%s377 + $0x20] sm:$0xff]
        %v1018 = vld [vmem:[%s377 + $0x28] sm:$0xff]
        %v1019 = vld [vmem:[%s377 + $0x30] sm:$0xff]
        %v1020 = vld [vmem:[%s377 + $0x38] sm:$0xff]
        %v1021 = vld [vmem:[%s377 + $0x40] sm:$0xff]
        %v1022 = vld [vmem:[%s377 + $0x48] sm:$0xff]
        %v1023 = vld [vmem:[%s377 + $0x50] sm:$0xff]
        %v1024 = vld [vmem:[%s377 + $0x58] sm:$0xff]
        %v1025 = vld [vmem:[%s377 + $0x60] sm:$0xff]
        %v1026 = vld [vmem:[%s377 + $0x68] sm:$0xff]
        %v1027 = vld [vmem:[%s377 + $0x70] sm:$0xff]
        %v1028 = vld [vmem:[%s377 + $0x78] sm:$0xff]
        %v1029 = vld [vmem:[%s377 + $0x80] sm:$0xff]
        %v1030 = vld [vmem:[%s377 + $0x88] sm:$0xff]
        %v1031 = vld [vmem:[%s377 + $0x90] sm:$0xff]
        %v1032 = vld [vmem:[%s377 + $0x98] sm:$0xff]
        %v1033 = vld [vmem:[%s377 + $0xa0] sm:$0xff]
        %v1034 = vld [vmem:[%s377 + $0xa8] sm:$0xff]
        %v1035 = vld [vmem:[%s377 + $0xb0] sm:$0xff]
        %v1036 = vld [vmem:[%s377 + $0xb8] sm:$0xff]
        %v1037 = vld [vmem:[%s377 + $0xc0] sm:$0xff]
        %v1038 = vld [vmem:[%s377 + $0xc8] sm:$0xff]
        %v1039 = vld [vmem:[%s377 + $0xd0] sm:$0xff]
        %v1040 = vld [vmem:[%s377 + $0xd8] sm:$0xff]
        %v1041 = vld [vmem:[%s377 + $0xe0] sm:$0xff]
        %v1042 = vld [vmem:[%s377 + $0xe8] sm:$0xff]
        %v1043 = vld [vmem:[%s377 + $0xf0] sm:$0xff]
        %v1044 = vld [vmem:[%s377 + $0xf8] sm:$0xff]
        %v1045 = vld [vmem:[%s377 + $0x100] sm:$0xff]
        %v1046 = vld [vmem:[%s377 + $0x108] sm:$0xff]
        %v1047 = vld [vmem:[%s377 + $0x110] sm:$0xff]
        %v1048 = vld [vmem:[%s377 + $0x118] sm:$0xff]
        %v1049 = vld [vmem:[%s377 + $0x120] sm:$0xff]
        %v1050 = vld [vmem:[%s377 + $0x128] sm:$0xff]
        %v1051 = vld [vmem:[%s377 + $0x130] sm:$0xff]
        %v1052 = vld [vmem:[%s377 + $0x138] sm:$0xff]
        %v1053 = vld [vmem:[%s377 + $0x140] sm:$0xff]
        %v1054 = vld [vmem:[%s377 + $0x148] sm:$0xff]
        %v1055 = vld [vmem:[%s377 + $0x150] sm:$0xff]
        %v1056 = vld [vmem:[%s377 + $0x158] sm:$0xff]
        %v1057 = vld [vmem:[%s377 + $0x160] sm:$0xff]
        %v1058 = vld [vmem:[%s377 + $0x168] sm:$0xff]
        %v1059 = vld [vmem:[%s377 + $0x170] sm:$0xff]
        %v1060 = vld [vmem:[%s377 + $0x178] sm:$0xff]
        %v1061 = vld [vmem:[%s377 + $0x180] sm:$0xff]
        %v1062 = vld [vmem:[%s377 + $0x188] sm:$0xff]
        %v1063 = vld [vmem:[%s377 + $0x190] sm:$0xff]
        %v1064 = vld [vmem:[%s377 + $0x198] sm:$0xff]
        %v1065 = vld [vmem:[%s377 + $0x1a0] sm:$0xff]
        %v1066 = vld [vmem:[%s377 + $0x1a8] sm:$0xff]
        %v1067 = vld [vmem:[%s377 + $0x1b0] sm:$0xff]
        %v1068 = vld [vmem:[%s377 + $0x1b8] sm:$0xff]
        %v1069 = vld [vmem:[%s377 + $0x1c0] sm:$0xff]
        %v1070 = vld [vmem:[%s377 + $0x1c8] sm:$0xff]
        %v1071 = vld [vmem:[%s377 + $0x1d0] sm:$0xff]
        %v1072 = vld [vmem:[%s377 + $0x1d8] sm:$0xff]
        %v1073 = vld [vmem:[%s377 + $0x1e0] sm:$0xff]
        %v1074 = vld [vmem:[%s377 + $0x1e8] sm:$0xff]
        %v1075 = vld [vmem:[%s377 + $0x1f0] sm:$0xff]
        %v1076 = vld [vmem:[%s377 + $0x1f8] sm:$0xff]
        %v1079 = vunpack.c.l.b16 %v1011
        %v1080 = vunpack.c.h.b16 %v1011
        %v1081 = vunpack.c.l.b16 %v1012
        %v1082 = vunpack.c.h.b16 %v1012
        %v1083 = vpack.c.b16 %v1081, %v1079
        %v1084 = vpack.c.b16 %v1082, %v1080
        %v1151 = vunpack.c.l.b16 %v1013
        %v1152 = vunpack.c.h.b16 %v1013
        %v1153 = vunpack.c.l.b16 %v1014
        %v1154 = vunpack.c.h.b16 %v1014
        %v1155 = vunpack.c.l.b16 %v1015
        %v1156 = vunpack.c.h.b16 %v1015
        %v1157 = vunpack.c.l.b16 %v1016
        %v1158 = vunpack.c.h.b16 %v1016
        %v1159 = vunpack.c.l.b16 %v1017
        %v1160 = vunpack.c.h.b16 %v1017
        %v1161 = vunpack.c.l.b16 %v1018
        %v1162 = vunpack.c.h.b16 %v1018
        %v1163 = vunpack.c.l.b16 %v1019
        %v1164 = vunpack.c.h.b16 %v1019
        %v1165 = vunpack.c.l.b16 %v1020
        %v1166 = vunpack.c.h.b16 %v1020
        %v1167 = vunpack.c.l.b16 %v1021
        %v1168 = vunpack.c.h.b16 %v1021
        %v1169 = vunpack.c.l.b16 %v1022
        %v1170 = vunpack.c.h.b16 %v1022
        %v1171 = vunpack.c.l.b16 %v1023
        %v1172 = vunpack.c.h.b16 %v1023
        %v1173 = vunpack.c.l.b16 %v1024
        %v1174 = vunpack.c.h.b16 %v1024
        %v1175 = vunpack.c.l.b16 %v1025
        %v1176 = vunpack.c.h.b16 %v1025
        %v1177 = vunpack.c.l.b16 %v1026
        %v1178 = vunpack.c.h.b16 %v1026
        %v1179 = vunpack.c.l.b16 %v1027
        %v1180 = vunpack.c.h.b16 %v1027
        %v1181 = vunpack.c.l.b16 %v1028
        %v1182 = vunpack.c.h.b16 %v1028
        %v1183 = vunpack.c.l.b16 %v1029
        %v1184 = vunpack.c.h.b16 %v1029
        %v1185 = vunpack.c.l.b16 %v1030
        %v1186 = vunpack.c.h.b16 %v1030
        %v1187 = vunpack.c.l.b16 %v1031
        %v1188 = vunpack.c.h.b16 %v1031
        %v1189 = vunpack.c.l.b16 %v1032
        %v1190 = vunpack.c.h.b16 %v1032
        %v1191 = vunpack.c.l.b16 %v1033
        %v1192 = vunpack.c.h.b16 %v1033
        %v1193 = vunpack.c.l.b16 %v1034
        %v1194 = vunpack.c.h.b16 %v1034
        %v1195 = vunpack.c.l.b16 %v1035
        %v1196 = vunpack.c.h.b16 %v1035
        %v1197 = vunpack.c.l.b16 %v1036
        %v1198 = vunpack.c.h.b16 %v1036
        %v1199 = vunpack.c.l.b16 %v1037
        %v1200 = vunpack.c.h.b16 %v1037
        %v1201 = vunpack.c.l.b16 %v1038
        %v1202 = vunpack.c.h.b16 %v1038
        %v1203 = vunpack.c.l.b16 %v1039
        %v1204 = vunpack.c.h.b16 %v1039
        %v1205 = vunpack.c.l.b16 %v1040
        %v1206 = vunpack.c.h.b16 %v1040
        %v1207 = vunpack.c.l.b16 %v1041
        %v1208 = vunpack.c.h.b16 %v1041
        %v1209 = vunpack.c.l.b16 %v1042
        %v1210 = vunpack.c.h.b16 %v1042
        %v1211 = vunpack.c.l.b16 %v1043
        %v1212 = vunpack.c.h.b16 %v1043
        %v1213 = vunpack.c.l.b16 %v1044
        %v1214 = vunpack.c.h.b16 %v1044
        %v1215 = vunpack.c.l.b16 %v1045
        %v1216 = vunpack.c.h.b16 %v1045
        %v1217 = vunpack.c.l.b16 %v1046
        %v1218 = vunpack.c.h.b16 %v1046
        %v1219 = vunpack.c.l.b16 %v1047
        %v1220 = vunpack.c.h.b16 %v1047
        %v1221 = vunpack.c.l.b16 %v1048
        %v1222 = vunpack.c.h.b16 %v1048
        %v1223 = vunpack.c.l.b16 %v1049
        %v1224 = vunpack.c.h.b16 %v1049
        %v1225 = vunpack.c.l.b16 %v1050
        %v1226 = vunpack.c.h.b16 %v1050
        %v1227 = vunpack.c.l.b16 %v1051
        %v1228 = vunpack.c.h.b16 %v1051
        %v1229 = vunpack.c.l.b16 %v1052
        %v1230 = vunpack.c.h.b16 %v1052
        %v1231 = vunpack.c.l.b16 %v1053
        %v1232 = vunpack.c.h.b16 %v1053
        %v1233 = vunpack.c.l.b16 %v1054
        %v1234 = vunpack.c.h.b16 %v1054
        %v1235 = vunpack.c.l.b16 %v1055
        %v1236 = vunpack.c.h.b16 %v1055
        %v1237 = vunpack.c.l.b16 %v1056
        %v1238 = vunpack.c.h.b16 %v1056
        %v1239 = vunpack.c.l.b16 %v1057
        %v1240 = vunpack.c.h.b16 %v1057
        %v1241 = vunpack.c.l.b16 %v1058
        %v1242 = vunpack.c.h.b16 %v1058
        %v1243 = vunpack.c.l.b16 %v1059
        %v1244 = vunpack.c.h.b16 %v1059
        %v1245 = vunpack.c.l.b16 %v1060
        %v1246 = vunpack.c.h.b16 %v1060
        %v1247 = vunpack.c.l.b16 %v1061
        %v1248 = vunpack.c.h.b16 %v1061
        %v1249 = vunpack.c.l.b16 %v1062
        %v1250 = vunpack.c.h.b16 %v1062
        %v1251 = vunpack.c.l.b16 %v1063
        %v1252 = vunpack.c.h.b16 %v1063
        %v1253 = vunpack.c.l.b16 %v1064
        %v1254 = vunpack.c.h.b16 %v1064
        %v1255 = vunpack.c.l.b16 %v1065
        %v1256 = vunpack.c.h.b16 %v1065
        %v1257 = vunpack.c.l.b16 %v1066
        %v1258 = vunpack.c.h.b16 %v1066
        %v1259 = vunpack.c.l.b16 %v1067
        %v1260 = vunpack.c.h.b16 %v1067
        %v1261 = vunpack.c.l.b16 %v1068
        %v1262 = vunpack.c.h.b16 %v1068
        %v1263 = vunpack.c.l.b16 %v1069
        %v1264 = vunpack.c.h.b16 %v1069
        %v1265 = vunpack.c.l.b16 %v1070
        %v1266 = vunpack.c.h.b16 %v1070
        %v1267 = vunpack.c.l.b16 %v1071
        %v1268 = vunpack.c.h.b16 %v1071
        %v1269 = vunpack.c.l.b16 %v1072
        %v1270 = vunpack.c.h.b16 %v1072
        %v1271 = vunpack.c.l.b16 %v1073
        %v1272 = vunpack.c.h.b16 %v1073
        %v1273 = vunpack.c.l.b16 %v1074
        %v1274 = vunpack.c.h.b16 %v1074
        %v1275 = vunpack.c.l.b16 %v1075
        %v1276 = vunpack.c.h.b16 %v1075
        %v1277 = vunpack.c.l.b16 %v1076
        %v1278 = vunpack.c.h.b16 %v1076
        %v1279 = vpack.c.b16 %v1155, %v1151
        %v1280 = vpack.c.b16 %v1156, %v1152
        %v1281 = vpack.c.b16 %v1157, %v1153
        %v1282 = vpack.c.b16 %v1158, %v1154
        %v1283 = vpack.c.b16 %v1163, %v1159
        %v1284 = vpack.c.b16 %v1164, %v1160
        %v1285 = vpack.c.b16 %v1165, %v1161
        %v1286 = vpack.c.b16 %v1166, %v1162
        %v1287 = vpack.c.b16 %v1171, %v1167
        %v1288 = vpack.c.b16 %v1172, %v1168
        %v1289 = vpack.c.b16 %v1173, %v1169
        %v1290 = vpack.c.b16 %v1174, %v1170
        %v1291 = vpack.c.b16 %v1179, %v1175
        %v1292 = vpack.c.b16 %v1180, %v1176
        %v1293 = vpack.c.b16 %v1181, %v1177
        %v1294 = vpack.c.b16 %v1182, %v1178
        %v1295 = vpack.c.b16 %v1187, %v1183
        %v1296 = vpack.c.b16 %v1188, %v1184
        %v1297 = vpack.c.b16 %v1189, %v1185
        %v1298 = vpack.c.b16 %v1190, %v1186
        %v1299 = vpack.c.b16 %v1195, %v1191
        %v1300 = vpack.c.b16 %v1196, %v1192
        %v1301 = vpack.c.b16 %v1197, %v1193
        %v1302 = vpack.c.b16 %v1198, %v1194
        %v1303 = vpack.c.b16 %v1203, %v1199
        %v1304 = vpack.c.b16 %v1204, %v1200
        %v1305 = vpack.c.b16 %v1205, %v1201
        %v1306 = vpack.c.b16 %v1206, %v1202
        %v1307 = vpack.c.b16 %v1211, %v1207
        %v1308 = vpack.c.b16 %v1212, %v1208
        %v1309 = vpack.c.b16 %v1213, %v1209
        %v1310 = vpack.c.b16 %v1214, %v1210
        %v1311 = vpack.c.b16 %v1219, %v1215
        %v1312 = vpack.c.b16 %v1220, %v1216
        %v1313 = vpack.c.b16 %v1221, %v1217
        %v1314 = vpack.c.b16 %v1222, %v1218
        %v1315 = vpack.c.b16 %v1227, %v1223
        %v1316 = vpack.c.b16 %v1228, %v1224
        %v1317 = vpack.c.b16 %v1229, %v1225
        %v1318 = vpack.c.b16 %v1230, %v1226
        %v1319 = vpack.c.b16 %v1235, %v1231
        %v1320 = vpack.c.b16 %v1236, %v1232
        %v1321 = vpack.c.b16 %v1237, %v1233
        %v1322 = vpack.c.b16 %v1238, %v1234
        %v1323 = vpack.c.b16 %v1243, %v1239
        %v1324 = vpack.c.b16 %v1244, %v1240
        %v1325 = vpack.c.b16 %v1245, %v1241
        %v1326 = vpack.c.b16 %v1246, %v1242
        %v1327 = vpack.c.b16 %v1251, %v1247
        %v1328 = vpack.c.b16 %v1252, %v1248
        %v1329 = vpack.c.b16 %v1253, %v1249
        %v1330 = vpack.c.b16 %v1254, %v1250
        %v1331 = vpack.c.b16 %v1259, %v1255
        %v1332 = vpack.c.b16 %v1260, %v1256
        %v1333 = vpack.c.b16 %v1261, %v1257
        %v1334 = vpack.c.b16 %v1262, %v1258
        %v1335 = vpack.c.b16 %v1267, %v1263
        %v1336 = vpack.c.b16 %v1268, %v1264
        %v1337 = vpack.c.b16 %v1269, %v1265
        %v1338 = vpack.c.b16 %v1270, %v1266
        %v1339 = vpack.c.b16 %v1275, %v1271
        %v1340 = vpack.c.b16 %v1276, %v1272
        %v1341 = vpack.c.b16 %v1277, %v1273
        %v1342 = vpack.c.b16 %v1278, %v1274
        %1407 = vmatprep.subr.bf16.mxu0 %v1308
        %1408 = vmatpush1.bf16.msra.mxu0 %v1307
        %1409 = vmatprep.subr.bf16.mxu0 %v1304
        %1410 = vmatpush1.bf16.msra.mxu0 %v1303
        %1411 = vmatprep.subr.bf16.mxu0 %v1300
        %1412 = vmatpush1.bf16.msra.mxu0 %v1299
        %1413 = vmatprep.subr.bf16.mxu0 %v1296
        %1414 = vmatpush1.bf16.msra.mxu0 %v1295
        %1415 = vmatprep.subr.bf16.mxu0 %v1292
        %1416 = vmatpush1.bf16.msra.mxu0 %v1291
        %1417 = vmatprep.subr.bf16.mxu0 %v1288
        %1418 = vmatpush1.bf16.msra.mxu0 %v1287
        %1419 = vmatprep.subr.bf16.mxu0 %v1284
        %1420 = vmatpush1.bf16.msra.mxu0 %v1283
        %1421 = vmatprep.subr.bf16.mxu0 %v1280
        %1422 = vmatpush1.bf16.msra.mxu0 %v1279
        %1423 = vmatprep.subr.bf16.mxu0 %v1340
        %1424 = vmatpush2.bf16.msra.mxu0 %v1339
        %1425 = vmatprep.subr.bf16.mxu0 %v1336
        %1426 = vmatpush2.bf16.msra.mxu0 %v1335
        %1427 = vmatprep.subr.bf16.mxu0 %v1332
        %1428 = vmatpush2.bf16.msra.mxu0 %v1331
        %1429 = vmatprep.subr.bf16.mxu0 %v1328
        %1430 = vmatpush2.bf16.msra.mxu0 %v1327
        %1431 = vmatprep.subr.bf16.mxu0 %v1324
        %1432 = vmatpush2.bf16.msra.mxu0 %v1323
        %1433 = vmatprep.subr.bf16.mxu0 %v1320
        %1434 = vmatpush2.bf16.msra.mxu0 %v1319
        %1435 = vmatprep.subr.bf16.mxu0 %v1316
        %1436 = vmatpush2.bf16.msra.mxu0 %v1315
        %1437 = vmatprep.subr.bf16.mxu0 %v1312
        %1438 = vmatpush2.bf16.msra.mxu0 %v1311
        %1439 = vmatprep.mubr.bf16.mxu0 %v1084
        %1440 = vmatmul.mubr.bf16.gmra.mxu0 %v1083
        %v1441 = vpop.f32.mrf.mxu0
        %v1442 = vadd.f32 0.0, %v1441
        %v1443 = vpop.f32.mrf.mxu0
        %v1444 = vadd.f32 0.0, %v1443
        %v1445 = vpop.f32.mrf.mxu0
        %v1446 = vadd.f32 0.0, %v1445
        %v1447 = vpop.f32.mrf.mxu0
        %v1448 = vadd.f32 0.0, %v1447
        %1449 = vdwg.mxu0
        %1450 = vmatprep.subr.bf16.mxu0 %v1310
        %1451 = vmatpush1.bf16.msra.mxu0 %v1309
        %1452 = vmatprep.subr.bf16.mxu0 %v1306
        %1453 = vmatpush1.bf16.msra.mxu0 %v1305
        %1454 = vmatprep.subr.bf16.mxu0 %v1302
        %1455 = vmatpush1.bf16.msra.mxu0 %v1301
        %1456 = vmatprep.subr.bf16.mxu0 %v1298
        %1457 = vmatpush1.bf16.msra.mxu0 %v1297
        %1458 = vmatprep.subr.bf16.mxu0 %v1294
        %1459 = vmatpush1.bf16.msra.mxu0 %v1293
        %1460 = vmatprep.subr.bf16.mxu0 %v1290
        %1461 = vmatpush1.bf16.msra.mxu0 %v1289
        %1462 = vmatprep.subr.bf16.mxu0 %v1286
        %1463 = vmatpush1.bf16.msra.mxu0 %v1285
        %1464 = vmatprep.subr.bf16.mxu0 %v1282
        %1465 = vmatpush1.bf16.msra.mxu0 %v1281
        %1466 = vmatprep.subr.bf16.mxu0 %v1342
        %1467 = vmatpush2.bf16.msra.mxu0 %v1341
        %1468 = vmatprep.subr.bf16.mxu0 %v1338
        %1469 = vmatpush2.bf16.msra.mxu0 %v1337
        %1470 = vmatprep.subr.bf16.mxu0 %v1334
        %1471 = vmatpush2.bf16.msra.mxu0 %v1333
        %1472 = vmatprep.subr.bf16.mxu0 %v1330
        %1473 = vmatpush2.bf16.msra.mxu0 %v1329
        %1474 = vmatprep.subr.bf16.mxu0 %v1326
        %1475 = vmatpush2.bf16.msra.mxu0 %v1325
        %1476 = vmatprep.subr.bf16.mxu0 %v1322
        %1477 = vmatpush2.bf16.msra.mxu0 %v1321
        %1478 = vmatprep.subr.bf16.mxu0 %v1318
        %1479 = vmatpush2.bf16.msra.mxu0 %v1317
        %1480 = vmatprep.subr.bf16.mxu0 %v1314
        %1481 = vmatpush2.bf16.msra.mxu0 %v1313
        %1482 = vmatprep.mubr.bf16.mxu0 %v1084
        %1483 = vmatmul.mubr.bf16.gmra.mxu0 %v1083
        %v1484 = vpop.f32.mrf.mxu0
        %v1485 = vadd.f32 0.0, %v1484
        %v1486 = vpop.f32.mrf.mxu0
        %v1487 = vadd.f32 0.0, %v1486
        %v1488 = vpop.f32.mrf.mxu0
        %v1489 = vadd.f32 0.0, %v1488
        %v1490 = vpop.f32.mrf.mxu0
        %v1491 = vadd.f32 0.0, %v1490
        %1492 = vdwg.mxu0
        %v1493 = vadd.f32 %v1003, %v1442
        %v1494 = vadd.f32 %v1004, %v1444
        %v1495 = vadd.f32 %v1005, %v1485
        %v1496 = vadd.f32 %v1006, %v1487
        %v1497 = vadd.f32 %v1007, %v1446
        %v1498 = vadd.f32 %v1008, %v1448
        %v1499 = vadd.f32 %v1009, %v1489
        %v1500 = vadd.f32 %v1010, %v1491
        %1501 = vst [vmem:[#allocation2] sm:$0xff] %v1493
        %1502 = vst [vmem:[#allocation2 + $0x8] sm:$0xff] %v1494
        %1503 = vst [vmem:[#allocation2 + $0x10] sm:$0xff] %v1495
        %1504 = vst [vmem:[#allocation2 + $0x18] sm:$0xff] %v1496
        %1505 = vst [vmem:[#allocation2 + $0x20] sm:$0xff] %v1497
        %1506 = vst [vmem:[#allocation2 + $0x28] sm:$0xff] %v1498
        %1507 = vst [vmem:[#allocation2 + $0x30] sm:$0xff] %v1499
        %1508 = vst [vmem:[#allocation2 + $0x38] sm:$0xff] %v1500
        %p1509 = scmp.eq.s32.totalorder %s34, 1
        // Predicated region
        $region77: #{tpu_custom_call.1} parent=47 // pred_check
          %p1510 = pneg %p1509
        $region78: #{tpu_custom_call.1} parent=47 // pred_check_branch
          %1512 = sbr.rel (%p1510) target = $region80
        $region79: #{tpu_custom_call.1} parent=47 // pred_region
          %v1513 = vld [vmem:[#allocation2] sm:$0xff]
          %v1514 = vld [vmem:[#allocation2 + $0x8] sm:$0xff]
          %v1515 = vld [vmem:[#allocation2 + $0x10] sm:$0xff]
          %v1516 = vld [vmem:[#allocation2 + $0x18] sm:$0xff]
          %v1517 = vld [vmem:[#allocation2 + $0x20] sm:$0xff]
          %v1518 = vld [vmem:[#allocation2 + $0x28] sm:$0xff]
          %v1519 = vld [vmem:[#allocation2 + $0x30] sm:$0xff]
          %v1520 = vld [vmem:[#allocation2 + $0x38] sm:$0xff]
          %1521 = vst [vmem:[%s429] sm:$0xff] %v1513
          %1522 = vst [vmem:[%s429 + $0x8] sm:$0xff] %v1514
          %1523 = vst [vmem:[%s429 + $0x10] sm:$0xff] %v1515
          %1524 = vst [vmem:[%s429 + $0x18] sm:$0xff] %v1516
          %1525 = vst [vmem:[%s429 + $0x20] sm:$0xff] %v1517
          %1526 = vst [vmem:[%s429 + $0x28] sm:$0xff] %v1518
          %1527 = vst [vmem:[%s429 + $0x30] sm:$0xff] %v1519
          %1528 = vst [vmem:[%s429 + $0x38] sm:$0xff] %v1520
        $region80: #{tpu_custom_call.1} parent=47 // pred_fallthru
          _
        %s1529 = sand.u32 %s211, 1
        %s1530 = scalar_lea.sflag [#allocation7], %s1529
        %s1531 = sand.u32 %s211, 1
        %s1532 = smul.addr %s1531, 64
        %s1533 = scalar_lea.vmem [#allocation16], %s1532
        // Predicated region
        $region81: #{tpu_custom_call.1} parent=47 // pred_check
          %p1534 = pneg %p221
        $region82: #{tpu_custom_call.1} parent=47 // pred_check_branch
          %1536 = sbr.rel (%p1534) target = $region84
        $region83: #{tpu_custom_call.1} parent=47 // pred_region
          %s1538 = ssub.s32 1024, 1024
          %1539 = vsyncadd %s1530, %s1538
          %s1540 = smul.addr %s33, 8
          %s1541 = smul.addr %s1540, 128
          %s1542 = scalar_lea.hbm %s7, %s1541
          %s1543 = sshll.u32 %s1533, 4
          %s1544 = int_to_ptr.vmem [resolvable:$true] %s1543
          %1549 = dma.vmem_to_hbm [thread:$0]  %s1544, 1024, %s1542, %s1530, 512, 512, 32
        $region84: #{tpu_custom_call.1} parent=47 // pred_fallthru
          _
      $region48: #{tpu_custom_call.1} parent=5 // pred_fallthru
        _
      %p1550 = scmp.le.s32.totalorder 2, %s24
      // Predicated region
      $region85: #{tpu_custom_call.1} parent=5 // pred_check
        %p1551 = pneg %p1550
      $region86: #{tpu_custom_call.1} parent=5 // pred_check_branch
        %1553 = sbr.rel (%p1551) target = $region88
      $region87: #{tpu_custom_call.1} parent=5 // pred_region
        %s1554 = ssub.s32 %s24, 2
        // Predicated region
        $region89: #{tpu_custom_call.1} parent=87 // pred_check
          %p1555 = pneg %p227
        $region90: #{tpu_custom_call.1} parent=87 // pred_check_branch
          %1557 = sbr.rel (%p1555) target = $region92
        $region91: #{tpu_custom_call.1} parent=87 // pred_region
          %s1558 = sand.u32 %s212, 1
          %s1559 = scalar_lea.sflag [#allocation7], %s1558
          %s1560 = sand.u32 %s212, 1
          %s1561 = smul.addr %s1560, 64
          %s1562 = scalar_lea.vmem [#allocation16], %s1561
          %1563 = dma.done %s1559, 1024
        $region92: #{tpu_custom_call.1} parent=87 // pred_fallthru
          _
      $region88: #{tpu_custom_call.1} parent=5 // pred_fallthru
        _
    $region6: #{tpu_custom_call.1} parent=1 // loop_footer
      %s28 = sadd.s32 1, %s24
    $region7: #{tpu_custom_call.1} parent=1 // loop_footer_branch
      %23 = sbr.rel target = $region3
    $region8: #{tpu_custom_call.1} parent=1 // loop_exit
      _
    %1564 = vsyncpa [#allocation6], 1
    %s1565 = scalar_lea.sflag [#allocation6], 1
    %1566 = vsyncpa %s1565, 1
    %1567 = vsyncpa [#allocation9], 1
    %s1568 = scalar_lea.sflag [#allocation9], 1
    %1569 = vsyncpa %s1568, 1
    %1570 = vsyncpa [#allocation12], 1
    %1571 = vsyncpa [#allocation15], 1
    %1572 = vsyncpa [#allocation7], 1
    %s1573 = scalar_lea.sflag [#allocation7], 1
    %1574 = vsyncpa %s1573, 1

</llo_original>
